<compile_context>
chip_gen: v7x
topology: tpu7x:2x2x1
jax: 0.10.0
libtpu: 0.0.40
codegen_flags: <defaults>
</compile_context>

<pallas_src>
import functools

import jax
import jax.numpy as jnp
from jax.experimental import pallas as pl
from jax.experimental.pallas import tpu as pltpu

N, C_IN, C_OUT, H, W = 2, 4, 8, 16, 16
KSIZE = 3
BN_EPS = 1e-5


def _fused_block_kernel(x_ref, m1_ref, m2_ref, d_ref, par_ref, o_ref,
                        xp1_ref, xp2_ref, *, width, cout):
    """Conv(3x3,'same')+BN+ReLU -> Conv(3x3,'same')+BN+ReLU -> ConvT(k=2,s=2).

      x   : (N, H, W*Cin)                 packed NHWC rows, lane = w*Cin + ci
      m1  : (3, W*Cin,  W*Cout)           banded conv1 weight per kh (kw folded in)
      m2  : (3, W*Cout, W*Cout)           banded conv2 weight per kh
      d   : (W*Cout, 2*2W*Cout)           packed deconv weight (pixel-shuffle order)
      par : (5, 2*2W*Cout)  rows = [g1, b1, g2, b2] (lanes 0:Cout) and deconv bias
      o   : (N*H, 2*2W*Cout)  lane = kh*2W*Cout + w_out*Cout + co  (row-major == NHWC)
      xp1 : (N, H+2, W*Cin)   H-padded scratch   xp2: (N, H+2, W*Cout)
    """
    n, h, wcin = x_ref.shape
    wcout = width * cout
    nh = n * h
    f32 = jnp.float32

    # One-hot channel-group matrices (built once from iota, reused by both BN stages):
    #   reduce_t (W*Cout, Cout): sums lanes {w*Cout+c} -> channel c
    #   expand   (Cout, W*Cout): broadcasts channel c -> lanes {w*Cout+c}
    lane = jax.lax.broadcasted_iota(jnp.int32, (cout, wcout), 1)
    chan = jax.lax.broadcasted_iota(jnp.int32, (cout, wcout), 0)
    expand = (lane % cout == chan).astype(f32)
    lane_t = jax.lax.broadcasted_iota(jnp.int32, (wcout, cout), 0)
    chan_t = jax.lax.broadcasted_iota(jnp.int32, (wcout, cout), 1)
    reduce_t = (lane_t % cout == chan_t).astype(f32)

    # Stage-1 input: pad in H only (W 'same' padding is folded into the band weights).
    xp1_ref[:, 0:1, :] = jnp.zeros((n, 1, wcin), f32)
    xp1_ref[:, h + 1:h + 2, :] = jnp.zeros((n, 1, wcin), f32)
    xp1_ref[:, 1:h + 1, :] = x_ref[...]

    def conv_bn_relu(xp_ref, m_ref, gamma, beta, k_lanes):
        # 3 row-shifted taps x banded weights; conv bias omitted on purpose
        # (cancelled exactly by the train-mode BN mean subtraction).
        acc = jnp.dot(xp_ref[:, 0:h, :].reshape(nh, k_lanes), m_ref[0],
                      preferred_element_type=f32)
        for kh in range(1, KSIZE):
            tap = xp_ref[:, kh:kh + h, :].reshape(nh, k_lanes)
            acc = acc + jnp.dot(tap, m_ref[kh], preferred_element_type=f32)

        # One-pass batch statistics (biased variance, eps=1e-5), per channel.
        inv_cnt = 1.0 / (nh * width)
        s1 = jnp.sum(acc, axis=0, keepdims=True)                    # (1, W*Cout)
        s2 = jnp.sum(acc * acc, axis=0, keepdims=True)
        mean_c = jnp.dot(s1, reduce_t, preferred_element_type=f32) * inv_cnt   # (1, Cout)
        ex2_c = jnp.dot(s2, reduce_t, preferred_element_type=f32) * inv_cnt
        scale_c = gamma * jax.lax.rsqrt(ex2_c - mean_c * mean_c + BN_EPS)
        shift_c = beta - mean_c * scale_c
        scale_l = jnp.dot(scale_c, expand, preferred_element_type=f32)          # (1, W*Cout)
        shift_l = jnp.dot(shift_c, expand, preferred_element_type=f32)
        return jnp.maximum(acc * scale_l + shift_l, 0.0)            # ReLU, (N*H, W*Cout)

    y1 = conv_bn_relu(xp1_ref, m1_ref,
                      par_ref[0:1, 0:cout], par_ref[1:2, 0:cout], wcin)

    # Conv1 output goes straight into the interior of conv2's H-padded scratch.
    xp2_ref[:, 0:1, :] = jnp.zeros((n, 1, wcout), f32)
    xp2_ref[:, h + 1:h + 2, :] = jnp.zeros((n, 1, wcout), f32)
    xp2_ref[:, 1:h + 1, :] = y1.reshape(n, h, wcout)

    y2 = conv_bn_relu(xp2_ref, m2_ref,
                      par_ref[2:3, 0:cout], par_ref[3:4, 0:cout], wcout)

    # ConvTranspose2d(k=2, s=2): one packed matmul + one bias broadcast; output lanes
    # are already in pixel-shuffled row-major order -> single dense 512-wide store.
    z = jnp.dot(y2, d_ref[...], preferred_element_type=f32) + par_ref[4:5, :]
    o_ref[...] = z


def init_params(key):
    ks = jax.random.split(key, 5)
    return {
        # PyTorch Conv2d weight layout: (Cout, Cin, kh, kw)
        "w1": 0.1 * jax.random.normal(ks[0], (C_OUT, C_IN, KSIZE, KSIZE), jnp.float32),
        "b1": 0.05 * jax.random.normal(ks[1], (C_OUT,), jnp.float32),
        "g1": 1.1 * jnp.ones((C_OUT,), jnp.float32),
        "bt1": 0.1 * jnp.ones((C_OUT,), jnp.float32),
        "w2": 0.1 * jax.random.normal(ks[2], (C_OUT, C_OUT, KSIZE, KSIZE), jnp.float32),
        "b2": 0.05 * jax.random.normal(ks[3], (C_OUT,), jnp.float32),
        "g2": 0.9 * jnp.ones((C_OUT,), jnp.float32),
        "bt2": -0.05 * jnp.ones((C_OUT,), jnp.float32),
        # PyTorch ConvTranspose2d weight layout: (Cin, Cout, kh, kw)
        "wt": 0.1 * jax.random.normal(ks[4], (C_OUT, C_OUT, 2, 2), jnp.float32),
        "btt": 0.02 * jnp.ones((C_OUT,), jnp.float32),
    }


@jax.jit
def encoder_decoder_block(x_nchw, p):
    n, cin, h, w = x_nchw.shape
    cout = p["w1"].shape[0]

    # Pack input NCHW -> (N, H, W*Cin): lane index = w*Cin + ci.
    x = jnp.transpose(x_nchw, (0, 2, 3, 1)).reshape(n, h, w * cin).astype(jnp.float32)

    # Banded block conv weights: M[kh][w_in*Ci + ci, w_out*Co + co] = W[kh, kw, ci, co]
    # with kw = w_in - w_out + 1 (band), which also encodes the 'same' W-padding.
    w1_hwio = jnp.transpose(p["w1"], (2, 3, 1, 0))            # (kh, kw, Cin, Cout)
    w2_hwio = jnp.transpose(p["w2"], (2, 3, 1, 0))
    band = jnp.stack([jnp.eye(w, k=1 - kw, dtype=jnp.float32) for kw in range(KSIZE)])
    m1 = jnp.einsum("kwv,akio->awivo", band, w1_hwio).reshape(KSIZE, w * cin, w * cout)
    m2 = jnp.einsum("kwv,akio->awivo", band, w2_hwio).reshape(KSIZE, w * cout, w * cout)

    # Packed ConvTranspose2d(k=2, s=2) weight:
    #   D[w*Cout + ci, kh*2W*Cout + (2w+kw)*Cout + co] = Wt[ci, co, kh, kw]
    q = jnp.arange(2 * w)
    place = (q[None, None, :] ==
             (2 * jnp.arange(w)[None, :, None] + jnp.arange(2)[:, None, None])
             ).astype(jnp.float32)                            # (kw, w, w_out)
    d = jnp.einsum("kwq,ioak->wiaqo", place, p["wt"]).reshape(w * cout, 4 * w * cout)

    # Small params packed into a single lane-dense array (one DMA):
    # rows 0..3 = gamma1, beta1, gamma2, beta2 (lanes 0:Cout); row 4 = deconv bias,
    # tiled over (kh, w_out) to match the packed output lane order.
    # Conv biases b1/b2 are intentionally NOT passed: exactly cancelled by train-mode BN.
    par = jnp.zeros((5, 4 * w * cout), jnp.float32)
    par = par.at[0, :cout].set(p["g1"])
    par = par.at[1, :cout].set(p["bt1"])
    par = par.at[2, :cout].set(p["g2"])
    par = par.at[3, :cout].set(p["bt2"])
    par = par.at[4, :].set(jnp.tile(p["btt"], 4 * w))

    z = pl.pallas_call(
        functools.partial(_fused_block_kernel, width=w, cout=cout),
        out_shape=jax.ShapeDtypeStruct((n * h, 4 * w * cout), jnp.float32),
        in_specs=[pl.BlockSpec(memory_space=pltpu.MemorySpace.VMEM) for _ in range(5)],
        out_specs=pl.BlockSpec(memory_space=pltpu.MemorySpace.VMEM),
        scratch_shapes=[
            pltpu.VMEM((n, h + 2, w * cin), jnp.float32),    # conv1 H-padded input
            pltpu.VMEM((n, h + 2, w * cout), jnp.float32),   # conv2 H-padded input
        ],
    )(x, m1, m2, d, par)

    # Free reshape: (N*H, 2*2W*Cout) row-major == (N, 2H, 2W, Cout).
    out = z.reshape(n, 2 * h, 2 * w, cout)
    return jnp.transpose(out, (0, 3, 1, 2))                   # back to NCHW


def reference(x_nchw, p):
    """Pure-JAX reference mirroring the PyTorch forward (train-mode BatchNorm)."""
    x = jnp.transpose(x_nchw, (0, 2, 3, 1)).astype(jnp.float32)

    def conv(x, w_oihw, b):
        w = jnp.transpose(w_oihw, (2, 3, 1, 0))  # HWIO
        y = jax.lax.conv_general_dilated(
            x, w, window_strides=(1, 1), padding="SAME",
            dimension_numbers=("NHWC", "HWIO", "NHWC"))
        return y + b[None, None, None, :]

    def bn_relu(y, g, beta):
        m = jnp.mean(y, axis=(0, 1, 2), keepdims=True)
        v = jnp.mean((y - m) ** 2, axis=(0, 1, 2), keepdims=True)
        return jax.nn.relu((y - m) / jnp.sqrt(v + BN_EPS) * g + beta)

    y = bn_relu(conv(x, p["w1"], p["b1"]), p["g1"], p["bt1"])
    y = bn_relu(conv(y, p["w2"], p["b2"]), p["g2"], p["bt2"])

    n, h, w, c = y.shape
    out = jnp.zeros((n, 2 * h, 2 * w, c), jnp.float32)
    for kh in range(2):
        for kw in range(2):
            contrib = jnp.einsum("nhwc,cd->nhwd", y, p["wt"][:, :, kh, kw]) + p["btt"]
            out = out.at[:, kh::2, kw::2, :].set(contrib)
    return jnp.transpose(out, (0, 3, 1, 2))


if __name__ == "__main__":
    key = jax.random.PRNGKey(0)
    kx, kp = jax.random.split(key)
    x = jax.random.normal(kx, (N, C_IN, H, W), jnp.float32)
    params = init_params(kp)

    out = jax.block_until_ready(encoder_decoder_block(x, params))
    assert out.shape == (N, C_OUT, 2 * H, 2 * W), out.shape

    ref = jax.block_until_ready(reference(x, params))
    assert jnp.allclose(out, ref, atol=1e-3, rtol=1e-3), \
        float(jnp.max(jnp.abs(out - ref)))

    print("KERNEL_OK")
</pallas_src>

<mosaic_0001>
module attributes {stable_mosaic.version = 11 : i64} {
  func.func @_fused_block_kernel(%arg0: memref<2x16x64xf32, #tpu.memory_space<vmem>>, %arg1: memref<3x64x128xf32, #tpu.memory_space<vmem>>, %arg2: memref<3x128x128xf32, #tpu.memory_space<vmem>>, %arg3: memref<128x512xf32, #tpu.memory_space<vmem>>, %arg4: memref<5x512xf32, #tpu.memory_space<vmem>>, %arg5: memref<32x512xf32, #tpu.memory_space<vmem>>, %arg6: memref<2x18x64xf32, #tpu.memory_space<vmem>>, %arg7: memref<2x18x128xf32, #tpu.memory_space<vmem>>) attributes {dimension_semantics = [], scalar_prefetch = 0 : i64, scratch_operands = 2 : i64, tpu.core_type = #tpu.core_type<tc>} {
    %0 = tpu.iota {dimensions = array<i32: 1>} : vector<8x128xi32>
    %1 = tpu.iota {dimensions = array<i32: 0>} : vector<8x128xi32>
    %c8_i32 = arith.constant 8 : i32
    %c0_i32 = arith.constant 0 : i32
    %2 = arith.cmpi eq, %c8_i32, %c0_i32 : i32
    %c1_i32 = arith.constant 1 : i32
    %3 = arith.select %2, %c1_i32, %c8_i32 : i32
    %4 = vector.broadcast %3 : i32 to vector<8x128xi32>
    %5 = arith.remsi %0, %4 : vector<8x128xi32>
    %c0_i32_0 = arith.constant 0 : i32
    %6 = vector.broadcast %c0_i32_0 : i32 to vector<8x128xi32>
    %7 = arith.cmpi ne, %5, %6 : vector<8x128xi32>
    %c0_i32_1 = arith.constant 0 : i32
    %8 = vector.broadcast %c0_i32_1 : i32 to vector<8x128xi32>
    %9 = arith.cmpi slt, %5, %8 : vector<8x128xi32>
    %c0_i32_2 = arith.constant 0 : i32
    %10 = arith.cmpi slt, %3, %c0_i32_2 : i32
    %11 = vector.broadcast %10 : i1 to vector<8x128xi1>
    %12 = vector.broadcast %11 : vector<8x128xi1> to vector<8x128xi1>
    %13 = arith.xori %9, %12 : vector<8x128xi1>
    %14 = arith.andi %13, %7 : vector<8x128xi1>
    %15 = vector.broadcast %3 : i32 to vector<8x128xi32>
    %16 = arith.addi %5, %15 : vector<8x128xi32>
    %17 = arith.select %14, %16, %5 : vector<8x128xi1>, vector<8x128xi32>
    %18 = arith.cmpi eq, %17, %1 : vector<8x128xi32>
    %19 = arith.extui %18 : vector<8x128xi1> to vector<8x128xi32>
    %20 = arith.sitofp %19 : vector<8x128xi32> to vector<8x128xf32>
    %21 = tpu.iota {dimensions = array<i32: 0>} : vector<128x8xi32>
    %22 = tpu.iota {dimensions = array<i32: 1>} : vector<128x8xi32>
    %c8_i32_3 = arith.constant 8 : i32
    %c0_i32_4 = arith.constant 0 : i32
    %23 = arith.cmpi eq, %c8_i32_3, %c0_i32_4 : i32
    %c1_i32_5 = arith.constant 1 : i32
    %24 = arith.select %23, %c1_i32_5, %c8_i32_3 : i32
    %25 = vector.broadcast %24 : i32 to vector<128x8xi32>
    %26 = arith.remsi %21, %25 : vector<128x8xi32>
    %c0_i32_6 = arith.constant 0 : i32
    %27 = vector.broadcast %c0_i32_6 : i32 to vector<128x8xi32>
    %28 = arith.cmpi ne, %26, %27 : vector<128x8xi32>
    %c0_i32_7 = arith.constant 0 : i32
    %29 = vector.broadcast %c0_i32_7 : i32 to vector<128x8xi32>
    %30 = arith.cmpi slt, %26, %29 : vector<128x8xi32>
    %c0_i32_8 = arith.constant 0 : i32
    %31 = arith.cmpi slt, %24, %c0_i32_8 : i32
    %32 = vector.broadcast %31 : i1 to vector<128x8xi1>
    %33 = vector.broadcast %32 : vector<128x8xi1> to vector<128x8xi1>
    %34 = arith.xori %30, %33 : vector<128x8xi1>
    %35 = arith.andi %34, %28 : vector<128x8xi1>
    %36 = vector.broadcast %24 : i32 to vector<128x8xi32>
    %37 = arith.addi %26, %36 : vector<128x8xi32>
    %38 = arith.select %35, %37, %26 : vector<128x8xi1>, vector<128x8xi32>
    %39 = arith.cmpi eq, %38, %22 : vector<128x8xi32>
    %40 = arith.extui %39 : vector<128x8xi1> to vector<128x8xi32>
    %41 = arith.sitofp %40 : vector<128x8xi32> to vector<128x8xf32>
    %cst = arith.constant 0.000000e+00 : f32
    %42 = vector.broadcast %cst : f32 to vector<2x1x64xf32>
    %c0 = arith.constant 0 : index
    %c0_9 = arith.constant 0 : index
    %c0_10 = arith.constant 0 : index
    %43 = vector.load %arg6[%c0, %c0_9, %c0_10] : memref<2x18x64xf32, #tpu.memory_space<vmem>>, vector<2x1x64xf32>
    tpu.vector_store %arg6[%c0, %c0_9, %c0_10], %42 {strides = array<i32>} : memref<2x18x64xf32, #tpu.memory_space<vmem>>, vector<2x1x64xf32>,
    %cst_11 = arith.constant 0.000000e+00 : f32
    %44 = vector.broadcast %cst_11 : f32 to vector<2x1x64xf32>
    %c0_12 = arith.constant 0 : index
    %c17 = arith.constant 17 : index
    %c0_13 = arith.constant 0 : index
    %45 = vector.load %arg6[%c0_12, %c17, %c0_13] : memref<2x18x64xf32, #tpu.memory_space<vmem>>, vector<2x1x64xf32>
    tpu.vector_store %arg6[%c0_12, %c17, %c0_13], %44 {strides = array<i32>} : memref<2x18x64xf32, #tpu.memory_space<vmem>>, vector<2x1x64xf32>,
    %c0_14 = arith.constant 0 : index
    %c0_15 = arith.constant 0 : index
    %c0_16 = arith.constant 0 : index
    %46 = vector.load %arg0[%c0_14, %c0_15, %c0_16] : memref<2x16x64xf32, #tpu.memory_space<vmem>>, vector<2x16x64xf32>
    %c0_17 = arith.constant 0 : index
    %c1 = arith.constant 1 : index
    %c0_18 = arith.constant 0 : index
    %47 = vector.load %arg6[%c0_17, %c1, %c0_18] : memref<2x18x64xf32, #tpu.memory_space<vmem>>, vector<2x16x64xf32>
    tpu.vector_store %arg6[%c0_17, %c1, %c0_18], %46 {strides = array<i32>} : memref<2x18x64xf32, #tpu.memory_space<vmem>>, vector<2x16x64xf32>,
    %c0_19 = arith.constant 0 : index
    %c0_20 = arith.constant 0 : index
    %48 = vector.load %arg4[%c0_19, %c0_20] : memref<5x512xf32, #tpu.memory_space<vmem>>, vector<1x8xf32>
    %c1_21 = arith.constant 1 : index
    %c0_22 = arith.constant 0 : index
    %49 = vector.load %arg4[%c1_21, %c0_22] : memref<5x512xf32, #tpu.memory_space<vmem>>, vector<1x8xf32>
    %c0_23 = arith.constant 0 : index
    %c0_24 = arith.constant 0 : index
    %c0_25 = arith.constant 0 : index
    %50 = vector.load %arg6[%c0_23, %c0_24, %c0_25] : memref<2x18x64xf32, #tpu.memory_space<vmem>>, vector<2x16x64xf32>
    %51 = vector.shape_cast %50 : vector<2x16x64xf32> to vector<32x64xf32>
    %c0_26 = arith.constant 0 : index
    %c0_27 = arith.constant 0 : index
    %c0_28 = arith.constant 0 : index
    %52 = vector.load %arg1[%c0_26, %c0_27, %c0_28] : memref<3x64x128xf32, #tpu.memory_space<vmem>>, vector<1x64x128xf32>
    %53 = vector.shape_cast %52 : vector<1x64x128xf32> to vector<64x128xf32>
    %cst_29 = arith.constant dense<0.000000e+00> : vector<32x128xf32>
    %54 = tpu.matmul %51, %53, %cst_29 {dimension_numbers = #tpu.dot_dimension_numbers<[1], [0], [0], [1], [0, 0, 1, 1], [], []>} : vector<32x64xf32>, vector<64x128xf32>, vector<32x128xf32> -> vector<32x128xf32>
    %c0_30 = arith.constant 0 : index
    %c1_31 = arith.constant 1 : index
    %c0_32 = arith.constant 0 : index
    %55 = vector.load %arg6[%c0_30, %c1_31, %c0_32] : memref<2x18x64xf32, #tpu.memory_space<vmem>>, vector<2x16x64xf32>
    %56 = vector.shape_cast %55 : vector<2x16x64xf32> to vector<32x64xf32>
    %c1_33 = arith.constant 1 : index
    %c0_34 = arith.constant 0 : index
    %c0_35 = arith.constant 0 : index
    %57 = vector.load %arg1[%c1_33, %c0_34, %c0_35] : memref<3x64x128xf32, #tpu.memory_space<vmem>>, vector<1x64x128xf32>
    %58 = vector.shape_cast %57 : vector<1x64x128xf32> to vector<64x128xf32>
    %cst_36 = arith.constant dense<0.000000e+00> : vector<32x128xf32>
    %59 = tpu.matmul %56, %58, %cst_36 {dimension_numbers = #tpu.dot_dimension_numbers<[1], [0], [0], [1], [0, 0, 1, 1], [], []>} : vector<32x64xf32>, vector<64x128xf32>, vector<32x128xf32> -> vector<32x128xf32>
    %60 = arith.addf %54, %59 : vector<32x128xf32>
    %c0_37 = arith.constant 0 : index
    %c2 = arith.constant 2 : index
    %c0_38 = arith.constant 0 : index
    %61 = vector.load %arg6[%c0_37, %c2, %c0_38] : memref<2x18x64xf32, #tpu.memory_space<vmem>>, vector<2x16x64xf32>
    %62 = vector.shape_cast %61 : vector<2x16x64xf32> to vector<32x64xf32>
    %c2_39 = arith.constant 2 : index
    %c0_40 = arith.constant 0 : index
    %c0_41 = arith.constant 0 : index
    %63 = vector.load %arg1[%c2_39, %c0_40, %c0_41] : memref<3x64x128xf32, #tpu.memory_space<vmem>>, vector<1x64x128xf32>
    %64 = vector.shape_cast %63 : vector<1x64x128xf32> to vector<64x128xf32>
    %cst_42 = arith.constant dense<0.000000e+00> : vector<32x128xf32>
    %65 = tpu.matmul %62, %64, %cst_42 {dimension_numbers = #tpu.dot_dimension_numbers<[1], [0], [0], [1], [0, 0, 1, 1], [], []>} : vector<32x64xf32>, vector<64x128xf32>, vector<32x128xf32> -> vector<32x128xf32>
    %66 = arith.addf %60, %65 : vector<32x128xf32>
    %cst_43 = arith.constant dense<0.000000e+00> : vector<128xf32>
    %67 = vector.multi_reduction <add>, %66, %cst_43 [0] : vector<32x128xf32> to vector<128xf32>
    %68 = vector.shape_cast %67 : vector<128xf32> to vector<1x128xf32>
    %69 = arith.mulf %66, %66 : vector<32x128xf32>
    %cst_44 = arith.constant dense<0.000000e+00> : vector<128xf32>
    %70 = vector.multi_reduction <add>, %69, %cst_44 [0] : vector<32x128xf32> to vector<128xf32>
    %71 = vector.shape_cast %70 : vector<128xf32> to vector<1x128xf32>
    %cst_45 = arith.constant dense<0.000000e+00> : vector<1x8xf32>
    %72 = tpu.matmul %68, %41, %cst_45 {dimension_numbers = #tpu.dot_dimension_numbers<[1], [0], [0], [1], [0, 0, 1, 1], [], []>} : vector<1x128xf32>, vector<128x8xf32>, vector<1x8xf32> -> vector<1x8xf32>
    %cst_46 = arith.constant 0.001953125 : f32
    %73 = vector.broadcast %cst_46 : f32 to vector<1x8xf32>
    %74 = arith.mulf %72, %73 : vector<1x8xf32>
    %cst_47 = arith.constant dense<0.000000e+00> : vector<1x8xf32>
    %75 = tpu.matmul %71, %41, %cst_47 {dimension_numbers = #tpu.dot_dimension_numbers<[1], [0], [0], [1], [0, 0, 1, 1], [], []>} : vector<1x128xf32>, vector<128x8xf32>, vector<1x8xf32> -> vector<1x8xf32>
    %cst_48 = arith.constant 0.001953125 : f32
    %76 = vector.broadcast %cst_48 : f32 to vector<1x8xf32>
    %77 = arith.mulf %75, %76 : vector<1x8xf32>
    %78 = arith.mulf %74, %74 : vector<1x8xf32>
    %79 = arith.subf %77, %78 : vector<1x8xf32>
    %cst_49 = arith.constant 9.99999974E-6 : f32
    %80 = vector.broadcast %cst_49 : f32 to vector<1x8xf32>
    %81 = arith.addf %79, %80 : vector<1x8xf32>
    %82 = math.rsqrt %81 : vector<1x8xf32>
    %83 = arith.mulf %48, %82 : vector<1x8xf32>
    %84 = arith.mulf %74, %83 : vector<1x8xf32>
    %85 = arith.subf %49, %84 : vector<1x8xf32>
    %cst_50 = arith.constant dense<0.000000e+00> : vector<1x128xf32>
    %86 = tpu.matmul %83, %20, %cst_50 {dimension_numbers = #tpu.dot_dimension_numbers<[1], [0], [0], [1], [0, 0, 1, 1], [], []>} : vector<1x8xf32>, vector<8x128xf32>, vector<1x128xf32> -> vector<1x128xf32>
    %cst_51 = arith.constant dense<0.000000e+00> : vector<1x128xf32>
    %87 = tpu.matmul %85, %20, %cst_51 {dimension_numbers = #tpu.dot_dimension_numbers<[1], [0], [0], [1], [0, 0, 1, 1], [], []>} : vector<1x8xf32>, vector<8x128xf32>, vector<1x128xf32> -> vector<1x128xf32>
    %88 = vector.broadcast %86 : vector<1x128xf32> to vector<32x128xf32>
    %89 = arith.mulf %66, %88 : vector<32x128xf32>
    %90 = vector.broadcast %87 : vector<1x128xf32> to vector<32x128xf32>
    %91 = arith.addf %89, %90 : vector<32x128xf32>
    %cst_52 = arith.constant 0.000000e+00 : f32
    %92 = vector.broadcast %cst_52 : f32 to vector<32x128xf32>
    %93 = arith.maximumf %91, %92 : vector<32x128xf32>
    %cst_53 = arith.constant 0.000000e+00 : f32
    %94 = vector.broadcast %cst_53 : f32 to vector<2x1x128xf32>
    %c0_54 = arith.constant 0 : index
    %c0_55 = arith.constant 0 : index
    %c0_56 = arith.constant 0 : index
    %95 = vector.load %arg7[%c0_54, %c0_55, %c0_56] : memref<2x18x128xf32, #tpu.memory_space<vmem>>, vector<2x1x128xf32>
    tpu.vector_store %arg7[%c0_54, %c0_55, %c0_56], %94 {strides = array<i32>} : memref<2x18x128xf32, #tpu.memory_space<vmem>>, vector<2x1x128xf32>,
    %cst_57 = arith.constant 0.000000e+00 : f32
    %96 = vector.broadcast %cst_57 : f32 to vector<2x1x128xf32>
    %c0_58 = arith.constant 0 : index
    %c17_59 = arith.constant 17 : index
    %c0_60 = arith.constant 0 : index
    %97 = vector.load %arg7[%c0_58, %c17_59, %c0_60] : memref<2x18x128xf32, #tpu.memory_space<vmem>>, vector<2x1x128xf32>
    tpu.vector_store %arg7[%c0_58, %c17_59, %c0_60], %96 {strides = array<i32>} : memref<2x18x128xf32, #tpu.memory_space<vmem>>, vector<2x1x128xf32>,
    %98 = vector.shape_cast %93 : vector<32x128xf32> to vector<2x16x128xf32>
    %c0_61 = arith.constant 0 : index
    %c1_62 = arith.constant 1 : index
    %c0_63 = arith.constant 0 : index
    %99 = vector.load %arg7[%c0_61, %c1_62, %c0_63] : memref<2x18x128xf32, #tpu.memory_space<vmem>>, vector<2x16x128xf32>
    tpu.vector_store %arg7[%c0_61, %c1_62, %c0_63], %98 {strides = array<i32>} : memref<2x18x128xf32, #tpu.memory_space<vmem>>, vector<2x16x128xf32>,
    %c2_64 = arith.constant 2 : index
    %c0_65 = arith.constant 0 : index
    %100 = vector.load %arg4[%c2_64, %c0_65] : memref<5x512xf32, #tpu.memory_space<vmem>>, vector<1x8xf32>
    %c3 = arith.constant 3 : index
    %c0_66 = arith.constant 0 : index
    %101 = vector.load %arg4[%c3, %c0_66] : memref<5x512xf32, #tpu.memory_space<vmem>>, vector<1x8xf32>
    %c0_67 = arith.constant 0 : index
    %c0_68 = arith.constant 0 : index
    %c0_69 = arith.constant 0 : index
    %102 = vector.load %arg7[%c0_67, %c0_68, %c0_69] : memref<2x18x128xf32, #tpu.memory_space<vmem>>, vector<2x16x128xf32>
    %103 = vector.shape_cast %102 : vector<2x16x128xf32> to vector<32x128xf32>
    %c0_70 = arith.constant 0 : index
    %c0_71 = arith.constant 0 : index
    %c0_72 = arith.constant 0 : index
    %104 = vector.load %arg2[%c0_70, %c0_71, %c0_72] : memref<3x128x128xf32, #tpu.memory_space<vmem>>, vector<1x128x128xf32>
    %105 = vector.shape_cast %104 : vector<1x128x128xf32> to vector<128x128xf32>
    %cst_73 = arith.constant dense<0.000000e+00> : vector<32x128xf32>
    %106 = tpu.matmul %103, %105, %cst_73 {dimension_numbers = #tpu.dot_dimension_numbers<[1], [0], [0], [1], [0, 0, 1, 1], [], []>} : vector<32x128xf32>, vector<128x128xf32>, vector<32x128xf32> -> vector<32x128xf32>
    %c0_74 = arith.constant 0 : index
    %c1_75 = arith.constant 1 : index
    %c0_76 = arith.constant 0 : index
    %107 = vector.load %arg7[%c0_74, %c1_75, %c0_76] : memref<2x18x128xf32, #tpu.memory_space<vmem>>, vector<2x16x128xf32>
    %108 = vector.shape_cast %107 : vector<2x16x128xf32> to vector<32x128xf32>
    %c1_77 = arith.constant 1 : index
    %c0_78 = arith.constant 0 : index
    %c0_79 = arith.constant 0 : index
    %109 = vector.load %arg2[%c1_77, %c0_78, %c0_79] : memref<3x128x128xf32, #tpu.memory_space<vmem>>, vector<1x128x128xf32>
    %110 = vector.shape_cast %109 : vector<1x128x128xf32> to vector<128x128xf32>
    %cst_80 = arith.constant dense<0.000000e+00> : vector<32x128xf32>
    %111 = tpu.matmul %108, %110, %cst_80 {dimension_numbers = #tpu.dot_dimension_numbers<[1], [0], [0], [1], [0, 0, 1, 1], [], []>} : vector<32x128xf32>, vector<128x128xf32>, vector<32x128xf32> -> vector<32x128xf32>
    %112 = arith.addf %106, %111 : vector<32x128xf32>
    %c0_81 = arith.constant 0 : index
    %c2_82 = arith.constant 2 : index
    %c0_83 = arith.constant 0 : index
    %113 = vector.load %arg7[%c0_81, %c2_82, %c0_83] : memref<2x18x128xf32, #tpu.memory_space<vmem>>, vector<2x16x128xf32>
    %114 = vector.shape_cast %113 : vector<2x16x128xf32> to vector<32x128xf32>
    %c2_84 = arith.constant 2 : index
    %c0_85 = arith.constant 0 : index
    %c0_86 = arith.constant 0 : index
    %115 = vector.load %arg2[%c2_84, %c0_85, %c0_86] : memref<3x128x128xf32, #tpu.memory_space<vmem>>, vector<1x128x128xf32>
    %116 = vector.shape_cast %115 : vector<1x128x128xf32> to vector<128x128xf32>
    %cst_87 = arith.constant dense<0.000000e+00> : vector<32x128xf32>
    %117 = tpu.matmul %114, %116, %cst_87 {dimension_numbers = #tpu.dot_dimension_numbers<[1], [0], [0], [1], [0, 0, 1, 1], [], []>} : vector<32x128xf32>, vector<128x128xf32>, vector<32x128xf32> -> vector<32x128xf32>
    %118 = arith.addf %112, %117 : vector<32x128xf32>
    %cst_88 = arith.constant dense<0.000000e+00> : vector<128xf32>
    %119 = vector.multi_reduction <add>, %118, %cst_88 [0] : vector<32x128xf32> to vector<128xf32>
    %120 = vector.shape_cast %119 : vector<128xf32> to vector<1x128xf32>
    %121 = arith.mulf %118, %118 : vector<32x128xf32>
    %cst_89 = arith.constant dense<0.000000e+00> : vector<128xf32>
    %122 = vector.multi_reduction <add>, %121, %cst_89 [0] : vector<32x128xf32> to vector<128xf32>
    %123 = vector.shape_cast %122 : vector<128xf32> to vector<1x128xf32>
    %cst_90 = arith.constant dense<0.000000e+00> : vector<1x8xf32>
    %124 = tpu.matmul %120, %41, %cst_90 {dimension_numbers = #tpu.dot_dimension_numbers<[1], [0], [0], [1], [0, 0, 1, 1], [], []>} : vector<1x128xf32>, vector<128x8xf32>, vector<1x8xf32> -> vector<1x8xf32>
    %cst_91 = arith.constant 0.001953125 : f32
    %125 = vector.broadcast %cst_91 : f32 to vector<1x8xf32>
    %126 = arith.mulf %124, %125 : vector<1x8xf32>
    %cst_92 = arith.constant dense<0.000000e+00> : vector<1x8xf32>
    %127 = tpu.matmul %123, %41, %cst_92 {dimension_numbers = #tpu.dot_dimension_numbers<[1], [0], [0], [1], [0, 0, 1, 1], [], []>} : vector<1x128xf32>, vector<128x8xf32>, vector<1x8xf32> -> vector<1x8xf32>
    %cst_93 = arith.constant 0.001953125 : f32
    %128 = vector.broadcast %cst_93 : f32 to vector<1x8xf32>
    %129 = arith.mulf %127, %128 : vector<1x8xf32>
    %130 = arith.mulf %126, %126 : vector<1x8xf32>
    %131 = arith.subf %129, %130 : vector<1x8xf32>
    %cst_94 = arith.constant 9.99999974E-6 : f32
    %132 = vector.broadcast %cst_94 : f32 to vector<1x8xf32>
    %133 = arith.addf %131, %132 : vector<1x8xf32>
    %134 = math.rsqrt %133 : vector<1x8xf32>
    %135 = arith.mulf %100, %134 : vector<1x8xf32>
    %136 = arith.mulf %126, %135 : vector<1x8xf32>
    %137 = arith.subf %101, %136 : vector<1x8xf32>
    %cst_95 = arith.constant dense<0.000000e+00> : vector<1x128xf32>
    %138 = tpu.matmul %135, %20, %cst_95 {dimension_numbers = #tpu.dot_dimension_numbers<[1], [0], [0], [1], [0, 0, 1, 1], [], []>} : vector<1x8xf32>, vector<8x128xf32>, vector<1x128xf32> -> vector<1x128xf32>
    %cst_96 = arith.constant dense<0.000000e+00> : vector<1x128xf32>
    %139 = tpu.matmul %137, %20, %cst_96 {dimension_numbers = #tpu.dot_dimension_numbers<[1], [0], [0], [1], [0, 0, 1, 1], [], []>} : vector<1x8xf32>, vector<8x128xf32>, vector<1x128xf32> -> vector<1x128xf32>
    %140 = vector.broadcast %138 : vector<1x128xf32> to vector<32x128xf32>
    %141 = arith.mulf %118, %140 : vector<32x128xf32>
    %142 = vector.broadcast %139 : vector<1x128xf32> to vector<32x128xf32>
    %143 = arith.addf %141, %142 : vector<32x128xf32>
    %cst_97 = arith.constant 0.000000e+00 : f32
    %144 = vector.broadcast %cst_97 : f32 to vector<32x128xf32>
    %145 = arith.maximumf %143, %144 : vector<32x128xf32>
    %c0_98 = arith.constant 0 : index
    %c0_99 = arith.constant 0 : index
    %146 = vector.load %arg3[%c0_98, %c0_99] : memref<128x512xf32, #tpu.memory_space<vmem>>, vector<128x512xf32>
    %cst_100 = arith.constant dense<0.000000e+00> : vector<32x512xf32>
    %147 = tpu.matmul %145, %146, %cst_100 {dimension_numbers = #tpu.dot_dimension_numbers<[1], [0], [0], [1], [0, 0, 1, 1], [], []>} : vector<32x128xf32>, vector<128x512xf32>, vector<32x512xf32> -> vector<32x512xf32>
    %c4 = arith.constant 4 : index
    %c0_101 = arith.constant 0 : index
    %148 = vector.load %arg4[%c4, %c0_101] : memref<5x512xf32, #tpu.memory_space<vmem>>, vector<1x512xf32>
    %149 = vector.broadcast %148 : vector<1x512xf32> to vector<32x512xf32>
    %150 = arith.addf %147, %149 : vector<32x512xf32>
    %c0_102 = arith.constant 0 : index
    %c0_103 = arith.constant 0 : index
    %151 = vector.load %arg5[%c0_102, %c0_103] : memref<32x512xf32, #tpu.memory_space<vmem>>, vector<32x512xf32>
    tpu.vector_store %arg5[%c0_102, %c0_103], %150 {strides = array<i32>} : memref<32x512xf32, #tpu.memory_space<vmem>>, vector<32x512xf32>,
    return
  }
}

</mosaic_0001>

<llo_original>
// kernel: tile.8
$region0: #{tile.8}
  #allocation0 [shape = 's32[1]{0}', space=sflag, size = 0x4, scoped, tag = 'scoped memory for tile.8']
  %s0 = inlined_call_operand.vmem [shape: f32[8], index: 0, kind: input, shape index: {}]
  %s1 = inlined_call_operand.vmem [shape: f32[64,8], index: 1, kind: output, shape index: {}]
  // Predicated region
  $region2: #{tile.8} parent=0 // pred_check
    _
  $region3: #{tile.8} parent=0 // pred_check_branch
    %3 = sbr.rel (0) target = $region5
  $region4: #{tile.8} parent=0 // pred_region
    _
  $region5: #{tile.8} parent=0 // pred_fallthru
    _
  %v4 = vld [vmem:[%s0] ss:$0 sm:$0xff]
  %5 = vst [vmem:[%s1] sm:$0xff] %v4
  %s6 = scalar_lea.vmem %s1, 8
  %7 = vst [vmem:[%s6] sm:$0xff] %v4
  %s8 = scalar_lea.vmem %s1, 16
  %9 = vst [vmem:[%s8] sm:$0xff] %v4
  %s10 = scalar_lea.vmem %s1, 24
  %11 = vst [vmem:[%s10] sm:$0xff] %v4
  %s12 = scalar_lea.vmem %s1, 32
  %13 = vst [vmem:[%s12] sm:$0xff] %v4
  %s14 = scalar_lea.vmem %s1, 40
  %15 = vst [vmem:[%s14] sm:$0xff] %v4
  %s16 = scalar_lea.vmem %s1, 48
  %17 = vst [vmem:[%s16] sm:$0xff] %v4
  %s18 = scalar_lea.vmem %s1, 56
  %19 = vst [vmem:[%s18] sm:$0xff] %v4

// kernel: encoder_decoder_block.1
$region0: #{encoder_decoder_block.1}
  #allocation0 [shape = 'u32[]', space=smem, size = 0x4, offset = 0x4, fixed_abs, tag = 'smem constant byte address 0x4 - core index']
  #allocation1 [shape = 'u32[144,128]{1,0:T(1,128)}', space=vmem, size = 0x12000, scoped, tag = 'internal scratch']
  #allocation2 [shape = 'f32[2,18,64]{2,1,0:T(8,128)}', space=vmem, size = 0x6000, scoped, tag = 'scratch operand']
  #allocation3 [shape = 'f32[2,18,128]{2,1,0:T(8,128)}', space=vmem, size = 0x6000, scoped, tag = 'scratch operand']
  %s0 = inlined_call_operand.vmem [shape: f32[2,16,64], index: 0, kind: input, shape index: {}]
  %s1 = inlined_call_operand.vmem [shape: f32[3,64,128], index: 1, kind: input, shape index: {}]
  %s2 = inlined_call_operand.vmem [shape: f32[3,128,128], index: 2, kind: input, shape index: {}]
  %s3 = inlined_call_operand.vmem [shape: f32[128,512], index: 3, kind: input, shape index: {}]
  %s4 = inlined_call_operand.vmem [shape: f32[5,512], index: 4, kind: input, shape index: {}]
  %s5 = inlined_call_operand.vmem [shape: f32[32,512], index: 5, kind: output, shape index: {}]
  %s6 = sld [smem:[#allocation0]]
  $region30: #{encoder_decoder_block.1} parent=0
    _
  %s8 = ssub.s32 1, %s6
  %s9 = scalar_select 0, %s8, %s6
  // Predicated region
  $region2: #{encoder_decoder_block.1} parent=0 // pred_check
    _
  $region3: #{encoder_decoder_block.1} parent=0 // pred_check_branch
    %11 = sbr.rel (0) target = $region5
  $region4: #{encoder_decoder_block.1} parent=0 // pred_region
    _
  $region5: #{encoder_decoder_block.1} parent=0 // pred_fallthru
    _
  // Predicated region
  $region6: #{encoder_decoder_block.1} parent=0 // pred_check
    _
  $region7: #{encoder_decoder_block.1} parent=0 // pred_check_branch
    %13 = sbr.rel (0) target = $region9
  $region8: #{encoder_decoder_block.1} parent=0 // pred_region
    _
  $region9: #{encoder_decoder_block.1} parent=0 // pred_fallthru
    _
  // Predicated region
  $region10: #{encoder_decoder_block.1} parent=0 // pred_check
    _
  $region11: #{encoder_decoder_block.1} parent=0 // pred_check_branch
    %15 = sbr.rel (0) target = $region13
  $region12: #{encoder_decoder_block.1} parent=0 // pred_region
    _
  $region13: #{encoder_decoder_block.1} parent=0 // pred_fallthru
    _
  // Predicated region
  $region14: #{encoder_decoder_block.1} parent=0 // pred_check
    _
  $region15: #{encoder_decoder_block.1} parent=0 // pred_check_branch
    %17 = sbr.rel (0) target = $region17
  $region16: #{encoder_decoder_block.1} parent=0 // pred_region
    _
  $region17: #{encoder_decoder_block.1} parent=0 // pred_fallthru
    _
  // Predicated region
  $region18: #{encoder_decoder_block.1} parent=0 // pred_check
    _
  $region19: #{encoder_decoder_block.1} parent=0 // pred_check_branch
    %19 = sbr.rel (0) target = $region21
  $region20: #{encoder_decoder_block.1} parent=0 // pred_region
    _
  $region21: #{encoder_decoder_block.1} parent=0 // pred_fallthru
    _
  %v20 = vlaneseq
  %v21 = vand.u32 %v20, 127
  %v22 = vlaneseq
  %v23 = vshrl.u32 %v22, 7
  %vm24 = vcmp.lt.s32.totalorder %v21, 0
  %v25 = vsub.s32 0, %v21
  %v26 = vsel %vm24, %v25, %v21
  %v27 = vshrl.u32 %v26, 3
  %v28 = vand.u32 %v26, 7
  %v29 = vsub.s32 0, %v28
  %v30 = vsel %vm24, %v29, %v28
  %vm31 = vcmp.ne.s32.totalorder %v30, 0
  %vm32 = vcmp.lt.s32.totalorder %v30, 0
  %vm33 = vmand %vm32, %vm31
  %v34 = vadd.s32 %v30, 8
  %v35 = vsel %vm33, %v34, %v30
  %vm36 = vcmp.eq.s32.totalorder %v35, %v23
  %v37 = vsel %vm36, 1, 0
  %v38 = vcvt.s32.f32 %v37
  %v39 = vadd.s32 %v23, 8
  %v40 = vadd.s32 %v23, 16
  %v41 = vadd.s32 %v23, 24
  %v42 = vadd.s32 %v23, 32
  %v43 = vadd.s32 %v23, 40
  %v44 = vadd.s32 %v23, 48
  %v45 = vadd.s32 %v23, 56
  %v46 = vadd.s32 %v23, 64
  %v47 = vadd.s32 %v23, 72
  %v48 = vadd.s32 %v23, 80
  %v49 = vadd.s32 %v23, 88
  %v50 = vadd.s32 %v23, 96
  %v51 = vadd.s32 %v23, 104
  %v52 = vadd.s32 %v23, 112
  %v53 = vadd.s32 %v23, 120
  %vm54 = vcmp.lt.s32.totalorder %v23, 0
  %v55 = vsub.s32 0, %v23
  %v56 = vsel %vm54, %v55, %v23
  %v57 = vshrl.u32 %v56, 3
  %v58 = vand.u32 %v56, 7
  %v59 = vsub.s32 0, %v58
  %v60 = vsel %vm54, %v59, %v58
  %vm61 = vcmp.lt.s32.totalorder %v39, 0
  %v62 = vsub.s32 0, %v39
  %v63 = vsel %vm61, %v62, %v39
  %v64 = vshrl.u32 %v63, 3
  %v65 = vand.u32 %v63, 7
  %v66 = vsub.s32 0, %v65
  %v67 = vsel %vm61, %v66, %v65
  %vm68 = vcmp.lt.s32.totalorder %v40, 0
  %v69 = vsub.s32 0, %v40
  %v70 = vsel %vm68, %v69, %v40
  %v71 = vshrl.u32 %v70, 3
  %v72 = vand.u32 %v70, 7
  %v73 = vsub.s32 0, %v72
  %v74 = vsel %vm68, %v73, %v72
  %vm75 = vcmp.lt.s32.totalorder %v41, 0
  %v76 = vsub.s32 0, %v41
  %v77 = vsel %vm75, %v76, %v41
  %v78 = vshrl.u32 %v77, 3
  %v79 = vand.u32 %v77, 7
  %v80 = vsub.s32 0, %v79
  %v81 = vsel %vm75, %v80, %v79
  %vm82 = vcmp.lt.s32.totalorder %v42, 0
  %v83 = vsub.s32 0, %v42
  %v84 = vsel %vm82, %v83, %v42
  %v85 = vshrl.u32 %v84, 3
  %v86 = vand.u32 %v84, 7
  %v87 = vsub.s32 0, %v86
  %v88 = vsel %vm82, %v87, %v86
  %vm89 = vcmp.lt.s32.totalorder %v43, 0
  %v90 = vsub.s32 0, %v43
  %v91 = vsel %vm89, %v90, %v43
  %v92 = vshrl.u32 %v91, 3
  %v93 = vand.u32 %v91, 7
  %v94 = vsub.s32 0, %v93
  %v95 = vsel %vm89, %v94, %v93
  %vm96 = vcmp.lt.s32.totalorder %v44, 0
  %v97 = vsub.s32 0, %v44
  %v98 = vsel %vm96, %v97, %v44
  %v99 = vshrl.u32 %v98, 3
  %v100 = vand.u32 %v98, 7
  %v101 = vsub.s32 0, %v100
  %v102 = vsel %vm96, %v101, %v100
  %vm103 = vcmp.lt.s32.totalorder %v45, 0
  %v104 = vsub.s32 0, %v45
  %v105 = vsel %vm103, %v104, %v45
  %v106 = vshrl.u32 %v105, 3
  %v107 = vand.u32 %v105, 7
  %v108 = vsub.s32 0, %v107
  %v109 = vsel %vm103, %v108, %v107
  %vm110 = vcmp.lt.s32.totalorder %v46, 0
  %v111 = vsub.s32 0, %v46
  %v112 = vsel %vm110, %v111, %v46
  %v113 = vshrl.u32 %v112, 3
  %v114 = vand.u32 %v112, 7
  %v115 = vsub.s32 0, %v114
  %v116 = vsel %vm110, %v115, %v114
  %vm117 = vcmp.lt.s32.totalorder %v47, 0
  %v118 = vsub.s32 0, %v47
  %v119 = vsel %vm117, %v118, %v47
  %v120 = vshrl.u32 %v119, 3
  %v121 = vand.u32 %v119, 7
  %v122 = vsub.s32 0, %v121
  %v123 = vsel %vm117, %v122, %v121
  %vm124 = vcmp.lt.s32.totalorder %v48, 0
  %v125 = vsub.s32 0, %v48
  %v126 = vsel %vm124, %v125, %v48
  %v127 = vshrl.u32 %v126, 3
  %v128 = vand.u32 %v126, 7
  %v129 = vsub.s32 0, %v128
  %v130 = vsel %vm124, %v129, %v128
  %vm131 = vcmp.lt.s32.totalorder %v49, 0
  %v132 = vsub.s32 0, %v49
  %v133 = vsel %vm131, %v132, %v49
  %v134 = vshrl.u32 %v133, 3
  %v135 = vand.u32 %v133, 7
  %v136 = vsub.s32 0, %v135
  %v137 = vsel %vm131, %v136, %v135
  %vm138 = vcmp.lt.s32.totalorder %v50, 0
  %v139 = vsub.s32 0, %v50
  %v140 = vsel %vm138, %v139, %v50
  %v141 = vshrl.u32 %v140, 3
  %v142 = vand.u32 %v140, 7
  %v143 = vsub.s32 0, %v142
  %v144 = vsel %vm138, %v143, %v142
  %vm145 = vcmp.lt.s32.totalorder %v51, 0
  %v146 = vsub.s32 0, %v51
  %v147 = vsel %vm145, %v146, %v51
  %v148 = vshrl.u32 %v147, 3
  %v149 = vand.u32 %v147, 7
  %v150 = vsub.s32 0, %v149
  %v151 = vsel %vm145, %v150, %v149
  %vm152 = vcmp.lt.s32.totalorder %v52, 0
  %v153 = vsub.s32 0, %v52
  %v154 = vsel %vm152, %v153, %v52
  %v155 = vshrl.u32 %v154, 3
  %v156 = vand.u32 %v154, 7
  %v157 = vsub.s32 0, %v156
  %v158 = vsel %vm152, %v157, %v156
  %vm159 = vcmp.lt.s32.totalorder %v53, 0
  %v160 = vsub.s32 0, %v53
  %v161 = vsel %vm159, %v160, %v53
  %v162 = vshrl.u32 %v161, 3
  %v163 = vand.u32 %v161, 7
  %v164 = vsub.s32 0, %v163
  %v165 = vsel %vm159, %v164, %v163
  %vm166 = vcmp.ne.s32.totalorder %v60, 0
  %vm167 = vcmp.ne.s32.totalorder %v67, 0
  %vm168 = vcmp.ne.s32.totalorder %v74, 0
  %vm169 = vcmp.ne.s32.totalorder %v81, 0
  %vm170 = vcmp.ne.s32.totalorder %v88, 0
  %vm171 = vcmp.ne.s32.totalorder %v95, 0
  %vm172 = vcmp.ne.s32.totalorder %v102, 0
  %vm173 = vcmp.ne.s32.totalorder %v109, 0
  %vm174 = vcmp.ne.s32.totalorder %v116, 0
  %vm175 = vcmp.ne.s32.totalorder %v123, 0
  %vm176 = vcmp.ne.s32.totalorder %v130, 0
  %vm177 = vcmp.ne.s32.totalorder %v137, 0
  %vm178 = vcmp.ne.s32.totalorder %v144, 0
  %vm179 = vcmp.ne.s32.totalorder %v151, 0
  %vm180 = vcmp.ne.s32.totalorder %v158, 0
  %vm181 = vcmp.ne.s32.totalorder %v165, 0
  %vm182 = vcmp.lt.s32.totalorder %v60, 0
  %vm183 = vcmp.lt.s32.totalorder %v67, 0
  %vm184 = vcmp.lt.s32.totalorder %v74, 0
  %vm185 = vcmp.lt.s32.totalorder %v81, 0
  %vm186 = vcmp.lt.s32.totalorder %v88, 0
  %vm187 = vcmp.lt.s32.totalorder %v95, 0
  %vm188 = vcmp.lt.s32.totalorder %v102, 0
  %vm189 = vcmp.lt.s32.totalorder %v109, 0
  %vm190 = vcmp.lt.s32.totalorder %v116, 0
  %vm191 = vcmp.lt.s32.totalorder %v123, 0
  %vm192 = vcmp.lt.s32.totalorder %v130, 0
  %vm193 = vcmp.lt.s32.totalorder %v137, 0
  %vm194 = vcmp.lt.s32.totalorder %v144, 0
  %vm195 = vcmp.lt.s32.totalorder %v151, 0
  %vm196 = vcmp.lt.s32.totalorder %v158, 0
  %vm197 = vcmp.lt.s32.totalorder %v165, 0
  %vm198 = vmand %vm182, %vm166
  %vm199 = vmand %vm183, %vm167
  %vm200 = vmand %vm184, %vm168
  %vm201 = vmand %vm185, %vm169
  %vm202 = vmand %vm186, %vm170
  %vm203 = vmand %vm187, %vm171
  %vm204 = vmand %vm188, %vm172
  %vm205 = vmand %vm189, %vm173
  %vm206 = vmand %vm190, %vm174
  %vm207 = vmand %vm191, %vm175
  %vm208 = vmand %vm192, %vm176
  %vm209 = vmand %vm193, %vm177
  %vm210 = vmand %vm194, %vm178
  %vm211 = vmand %vm195, %vm179
  %vm212 = vmand %vm196, %vm180
  %vm213 = vmand %vm197, %vm181
  %v214 = vadd.s32 %v60, 8
  %v215 = vadd.s32 %v67, 8
  %v216 = vadd.s32 %v74, 8
  %v217 = vadd.s32 %v81, 8
  %v218 = vadd.s32 %v88, 8
  %v219 = vadd.s32 %v95, 8
  %v220 = vadd.s32 %v102, 8
  %v221 = vadd.s32 %v109, 8
  %v222 = vadd.s32 %v116, 8
  %v223 = vadd.s32 %v123, 8
  %v224 = vadd.s32 %v130, 8
  %v225 = vadd.s32 %v137, 8
  %v226 = vadd.s32 %v144, 8
  %v227 = vadd.s32 %v151, 8
  %v228 = vadd.s32 %v158, 8
  %v229 = vadd.s32 %v165, 8
  %v230 = vsel %vm198, %v214, %v60
  %v231 = vsel %vm199, %v215, %v67
  %v232 = vsel %vm200, %v216, %v74
  %v233 = vsel %vm201, %v217, %v81
  %v234 = vsel %vm202, %v218, %v88
  %v235 = vsel %vm203, %v219, %v95
  %v236 = vsel %vm204, %v220, %v102
  %v237 = vsel %vm205, %v221, %v109
  %v238 = vsel %vm206, %v222, %v116
  %v239 = vsel %vm207, %v223, %v123
  %v240 = vsel %vm208, %v224, %v130
  %v241 = vsel %vm209, %v225, %v137
  %v242 = vsel %vm210, %v226, %v144
  %v243 = vsel %vm211, %v227, %v151
  %v244 = vsel %vm212, %v228, %v158
  %v245 = vsel %vm213, %v229, %v165
  %vm246 = vcmp.eq.s32.totalorder %v230, %v21
  %vm247 = vcmp.eq.s32.totalorder %v231, %v21
  %vm248 = vcmp.eq.s32.totalorder %v232, %v21
  %vm249 = vcmp.eq.s32.totalorder %v233, %v21
  %vm250 = vcmp.eq.s32.totalorder %v234, %v21
  %vm251 = vcmp.eq.s32.totalorder %v235, %v21
  %vm252 = vcmp.eq.s32.totalorder %v236, %v21
  %vm253 = vcmp.eq.s32.totalorder %v237, %v21
  %vm254 = vcmp.eq.s32.totalorder %v238, %v21
  %vm255 = vcmp.eq.s32.totalorder %v239, %v21
  %vm256 = vcmp.eq.s32.totalorder %v240, %v21
  %vm257 = vcmp.eq.s32.totalorder %v241, %v21
  %vm258 = vcmp.eq.s32.totalorder %v242, %v21
  %vm259 = vcmp.eq.s32.totalorder %v243, %v21
  %vm260 = vcmp.eq.s32.totalorder %v244, %v21
  %vm261 = vcmp.eq.s32.totalorder %v245, %v21
  %v262 = vsel %vm246, 1, 0
  %v263 = vsel %vm247, 1, 0
  %v264 = vsel %vm248, 1, 0
  %v265 = vsel %vm249, 1, 0
  %v266 = vsel %vm250, 1, 0
  %v267 = vsel %vm251, 1, 0
  %v268 = vsel %vm252, 1, 0
  %v269 = vsel %vm253, 1, 0
  %v270 = vsel %vm254, 1, 0
  %v271 = vsel %vm255, 1, 0
  %v272 = vsel %vm256, 1, 0
  %v273 = vsel %vm257, 1, 0
  %v274 = vsel %vm258, 1, 0
  %v275 = vsel %vm259, 1, 0
  %v276 = vsel %vm260, 1, 0
  %v277 = vsel %vm261, 1, 0
  %v278 = vcvt.s32.f32 %v262
  %v279 = vcvt.s32.f32 %v263
  %v280 = vcvt.s32.f32 %v264
  %v281 = vcvt.s32.f32 %v265
  %v282 = vcvt.s32.f32 %v266
  %v283 = vcvt.s32.f32 %v267
  %v284 = vcvt.s32.f32 %v268
  %v285 = vcvt.s32.f32 %v269
  %v286 = vcvt.s32.f32 %v270
  %v287 = vcvt.s32.f32 %v271
  %v288 = vcvt.s32.f32 %v272
  %v289 = vcvt.s32.f32 %v273
  %v290 = vcvt.s32.f32 %v274
  %v291 = vcvt.s32.f32 %v275
  %v292 = vcvt.s32.f32 %v276
  %v293 = vcvt.s32.f32 %v277
  %vm294 = vcmask 516096
  %295 = vst.msk [vmem:[#allocation2] sm:$0x1] %vm294, 0.0
  %296 = vst.msk [vmem:[#allocation2 + $0x18] sm:$0x1] %vm294, 0.0
  %297 = vst.msk [vmem:[#allocation2 + $0x11] sm:$0x1] %vm294, 0.0
  %298 = vst.msk [vmem:[#allocation2 + $0x29] sm:$0x1] %vm294, 0.0
  %v299 = vld [vmem:[%s0] sm:$0xff]
  %v300 = vld [vmem:[%s0 + $0x8] sm:$0xff]
  %v301 = vld [vmem:[%s0 + $0x10] sm:$0xff]
  %v302 = vld [vmem:[%s0 + $0x18] sm:$0xff]
  %vm303 = vcmask 523264
  %304 = vst.msk [vmem:[#allocation2 + $0x1] sm:$0xff] %vm303, %v299
  %305 = vst.msk [vmem:[#allocation2 + $0x9] sm:$0xff] %vm303, %v300
  %306 = vst.msk [vmem:[#allocation2 + $0x19] sm:$0xff] %vm303, %v301
  %307 = vst.msk [vmem:[#allocation2 + $0x21] sm:$0xff] %vm303, %v302
  %v308 = vld [vmem:[%s4] ss:$0 sm:$0xff]
  %v309 = vld [vmem:[%s4 + $0x1] ss:$0 sm:$0xff]
  %v310 = vld [vmem:[#allocation2] sm:$0xff]
  %v311 = vld [vmem:[#allocation2 + $0x8] sm:$0xff]
  %v312 = vld [vmem:[#allocation2 + $0x18] sm:$0xff]
  %v313 = vld [vmem:[#allocation2 + $0x20] sm:$0xff]
  %v314 = vld [vmem:[%s1] sm:$0xff]
  %v315 = vld [vmem:[%s1 + $0x8] sm:$0xff]
  %v316 = vld [vmem:[%s1 + $0x10] sm:$0xff]
  %v317 = vld [vmem:[%s1 + $0x18] sm:$0xff]
  %v318 = vld [vmem:[%s1 + $0x20] sm:$0xff]
  %v319 = vld [vmem:[%s1 + $0x28] sm:$0xff]
  %v320 = vld [vmem:[%s1 + $0x30] sm:$0xff]
  %v321 = vld [vmem:[%s1 + $0x38] sm:$0xff]
  %v322 = vld [vmem:[#allocation2 + $0x1] sm:$0xff]
  %v323 = vld [vmem:[#allocation2 + $0x9] sm:$0xff]
  %v324 = vld [vmem:[#allocation2 + $0x19] sm:$0xff]
  %v325 = vld [vmem:[#allocation2 + $0x21] sm:$0xff]
  %s326 = scalar_lea.vmem %s1, 64
  %v327 = vld [vmem:[%s326] sm:$0xff]
  %v328 = vld [vmem:[%s326 + $0x8] sm:$0xff]
  %v329 = vld [vmem:[%s326 + $0x10] sm:$0xff]
  %v330 = vld [vmem:[%s326 + $0x18] sm:$0xff]
  %v331 = vld [vmem:[%s326 + $0x20] sm:$0xff]
  %v332 = vld [vmem:[%s326 + $0x28] sm:$0xff]
  %v333 = vld [vmem:[%s326 + $0x30] sm:$0xff]
  %v334 = vld [vmem:[%s326 + $0x38] sm:$0xff]
  %v336 = vsel %vm303, %v322, 0
  %v339 = vsel %vm303, %v323, 0
  %v342 = vsel %vm303, %v324, 0
  %v345 = vsel %vm303, %v325, 0
  %347 = vmatprep.subr.mxu0 0.0
  %348 = vmatpush1.msra.mxu0 %v327
  %349 = vmatprep.subr.mxu0 0.0
  %350 = vmatpush1.msra.mxu0 %v328
  %351 = vmatprep.subr.mxu0 0.0
  %352 = vmatpush1.msra.mxu0 %v329
  %353 = vmatprep.subr.mxu0 0.0
  %354 = vmatpush1.msra.mxu0 %v330
  %355 = vmatprep.subr.mxu0 0.0
  %356 = vmatpush1.msra.mxu0 %v331
  %357 = vmatprep.subr.mxu0 0.0
  %358 = vmatpush1.msra.mxu0 %v332
  %359 = vmatprep.subr.mxu0 0.0
  %360 = vmatpush1.msra.mxu0 %v333
  %361 = vmatprep.subr.mxu0 0.0
  %362 = vmatpush1.msra.mxu0 %v334
  %363 = vmatprep.subr.mxu0 0.0
  %364 = vmatpush1.msra.mxu0 0.0
  %365 = vmatprep.subr.mxu0 0.0
  %366 = vmatpush1.msra.mxu0 0.0
  %367 = vmatprep.subr.mxu0 0.0
  %368 = vmatpush1.msra.mxu0 0.0
  %369 = vmatprep.subr.mxu0 0.0
  %370 = vmatpush1.msra.mxu0 0.0
  %371 = vmatprep.subr.mxu0 0.0
  %372 = vmatpush1.msra.mxu0 0.0
  %373 = vmatprep.subr.mxu0 0.0
  %374 = vmatpush1.msra.mxu0 0.0
  %375 = vmatprep.subr.mxu0 0.0
  %376 = vmatpush1.msra.mxu0 0.0
  %377 = vmatprep.subr.mxu0 0.0
  %378 = vmatpush1.msra.mxu0 0.0
  %379 = vmatprep.subr.mxu0 0.0
  %380 = vmatpush1.msra.mxu0 0.0
  %381 = vmatprep.subr.mxu0 0.0
  %382 = vmatpush1.msra.mxu0 0.0
  %383 = vmatprep.subr.mxu0 0.0
  %384 = vmatpush1.msra.mxu0 0.0
  %385 = vmatprep.subr.mxu0 0.0
  %386 = vmatpush1.msra.mxu0 0.0
  %387 = vmatprep.subr.mxu0 0.0
  %388 = vmatpush1.msra.mxu0 0.0
  %389 = vmatprep.subr.mxu0 0.0
  %390 = vmatpush1.msra.mxu0 0.0
  %391 = vmatprep.subr.mxu0 0.0
  %392 = vmatpush1.msra.mxu0 0.0
  %393 = vmatprep.subr.mxu0 0.0
  %394 = vmatpush1.msra.mxu0 0.0
  %395 = vmatprep.subr.mxu0 0.0
  %396 = vmatpush1.msra.mxu0 0.0
  %397 = vmatprep.subr.mxu0 0.0
  %398 = vmatpush1.msra.mxu0 0.0
  %399 = vmatprep.subr.mxu0 0.0
  %400 = vmatpush1.msra.mxu0 0.0
  %401 = vmatprep.subr.mxu0 0.0
  %402 = vmatpush1.msra.mxu0 0.0
  %403 = vmatprep.subr.mxu0 0.0
  %404 = vmatpush1.msra.mxu0 0.0
  %405 = vmatprep.subr.mxu0 0.0
  %406 = vmatpush1.msra.mxu0 0.0
  %407 = vmatprep.subr.mxu0 0.0
  %408 = vmatpush1.msra.mxu0 0.0
  %409 = vmatprep.subr.mxu0 0.0
  %410 = vmatpush1.msra.mxu0 0.0
  %411 = vmatprep.mubr.f32.mxu0 0.0
  %412 = vmatmul.mubr.f32.gmra.mrb[0].mxu0 %v336
  %v413 = vpop.f32.mrb[0].mxu0
  %v414 = vadd.f32 0.0, %v413
  %v415 = vpop.f32.mrb[0].mxu0
  %416 = vmatprep.mubr.f32.mxu0 0.0
  %417 = vmatmul.mubr.f32.gmra.mrb[0].mxu0 %v339
  %v418 = vpop.f32.mrb[0].mxu0
  %v419 = vadd.f32 0.0, %v418
  %v420 = vpop.f32.mrb[0].mxu0
  %421 = vmatprep.mubr.f32.mxu0 0.0
  %422 = vmatmul.mubr.f32.gmra.mrb[0].mxu0 %v342
  %v423 = vpop.f32.mrb[0].mxu0
  %v424 = vadd.f32 0.0, %v423
  %v425 = vpop.f32.mrb[0].mxu0
  %426 = vmatprep.mubr.f32.mxu0 0.0
  %427 = vmatmul.mubr.f32.gmra.mrb[0].mxu0 %v345
  %v428 = vpop.f32.mrb[0].mxu0
  %v429 = vadd.f32 0.0, %v428
  %v430 = vpop.f32.mrb[0].mxu0
  %431 = vdwg.mxu0
  %v433 = vsel %vm303, %v310, 0
  %v436 = vsel %vm303, %v311, 0
  %v439 = vsel %vm303, %v312, 0
  %v442 = vsel %vm303, %v313, 0
  %444 = vmatprep.subr.mxu0 0.0
  %445 = vmatpush1.msra.mxu0 %v314
  %446 = vmatprep.subr.mxu0 0.0
  %447 = vmatpush1.msra.mxu0 %v315
  %448 = vmatprep.subr.mxu0 0.0
  %449 = vmatpush1.msra.mxu0 %v316
  %450 = vmatprep.subr.mxu0 0.0
  %451 = vmatpush1.msra.mxu0 %v317
  %452 = vmatprep.subr.mxu0 0.0
  %453 = vmatpush1.msra.mxu0 %v318
  %454 = vmatprep.subr.mxu0 0.0
  %455 = vmatpush1.msra.mxu0 %v319
  %456 = vmatprep.subr.mxu0 0.0
  %457 = vmatpush1.msra.mxu0 %v320
  %458 = vmatprep.subr.mxu0 0.0
  %459 = vmatpush1.msra.mxu0 %v321
  %460 = vmatprep.subr.mxu0 0.0
  %461 = vmatpush1.msra.mxu0 0.0
  %462 = vmatprep.subr.mxu0 0.0
  %463 = vmatpush1.msra.mxu0 0.0
  %464 = vmatprep.subr.mxu0 0.0
  %465 = vmatpush1.msra.mxu0 0.0
  %466 = vmatprep.subr.mxu0 0.0
  %467 = vmatpush1.msra.mxu0 0.0
  %468 = vmatprep.subr.mxu0 0.0
  %469 = vmatpush1.msra.mxu0 0.0
  %470 = vmatprep.subr.mxu0 0.0
  %471 = vmatpush1.msra.mxu0 0.0
  %472 = vmatprep.subr.mxu0 0.0
  %473 = vmatpush1.msra.mxu0 0.0
  %474 = vmatprep.subr.mxu0 0.0
  %475 = vmatpush1.msra.mxu0 0.0
  %476 = vmatprep.subr.mxu0 0.0
  %477 = vmatpush1.msra.mxu0 0.0
  %478 = vmatprep.subr.mxu0 0.0
  %479 = vmatpush1.msra.mxu0 0.0
  %480 = vmatprep.subr.mxu0 0.0
  %481 = vmatpush1.msra.mxu0 0.0
  %482 = vmatprep.subr.mxu0 0.0
  %483 = vmatpush1.msra.mxu0 0.0
  %484 = vmatprep.subr.mxu0 0.0
  %485 = vmatpush1.msra.mxu0 0.0
  %486 = vmatprep.subr.mxu0 0.0
  %487 = vmatpush1.msra.mxu0 0.0
  %488 = vmatprep.subr.mxu0 0.0
  %489 = vmatpush1.msra.mxu0 0.0
  %490 = vmatprep.subr.mxu0 0.0
  %491 = vmatpush1.msra.mxu0 0.0
  %492 = vmatprep.subr.mxu0 0.0
  %493 = vmatpush1.msra.mxu0 0.0
  %494 = vmatprep.subr.mxu0 0.0
  %495 = vmatpush1.msra.mxu0 0.0
  %496 = vmatprep.subr.mxu0 0.0
  %497 = vmatpush1.msra.mxu0 0.0
  %498 = vmatprep.subr.mxu0 0.0
  %499 = vmatpush1.msra.mxu0 0.0
  %500 = vmatprep.subr.mxu0 0.0
  %501 = vmatpush1.msra.mxu0 0.0
  %502 = vmatprep.subr.mxu0 0.0
  %503 = vmatpush1.msra.mxu0 0.0
  %504 = vmatprep.subr.mxu0 0.0
  %505 = vmatpush1.msra.mxu0 0.0
  %506 = vmatprep.subr.mxu0 0.0
  %507 = vmatpush1.msra.mxu0 0.0
  %508 = vmatprep.mubr.f32.mxu0 0.0
  %509 = vmatmul.mubr.f32.gmra.mrb[0].mxu0 %v433
  %v510 = vpop.f32.mrb[0].mxu0
  %v511 = vadd.f32 %v414, %v510
  %v512 = vpop.f32.mrb[0].mxu0
  %513 = vmatprep.mubr.f32.mxu0 0.0
  %514 = vmatmul.mubr.f32.gmra.mrb[0].mxu0 %v436
  %v515 = vpop.f32.mrb[0].mxu0
  %v516 = vadd.f32 %v419, %v515
  %v517 = vpop.f32.mrb[0].mxu0
  %518 = vmatprep.mubr.f32.mxu0 0.0
  %519 = vmatmul.mubr.f32.gmra.mrb[0].mxu0 %v439
  %v520 = vpop.f32.mrb[0].mxu0
  %v521 = vadd.f32 %v424, %v520
  %v522 = vpop.f32.mrb[0].mxu0
  %523 = vmatprep.mubr.f32.mxu0 0.0
  %524 = vmatmul.mubr.f32.gmra.mrb[0].mxu0 %v442
  %v525 = vpop.f32.mrb[0].mxu0
  %v526 = vadd.f32 %v429, %v525
  %v527 = vpop.f32.mrb[0].mxu0
  %528 = vdwg.mxu0
  %v529 = vld [vmem:[#allocation2 + $0x2] sm:$0xff]
  %v530 = vld [vmem:[#allocation2 + $0xa] sm:$0xff]
  %v531 = vld [vmem:[#allocation2 + $0x1a] sm:$0xff]
  %v532 = vld [vmem:[#allocation2 + $0x22] sm:$0xff]
  %s533 = scalar_lea.vmem %s1, 128
  %v534 = vld [vmem:[%s533] sm:$0xff]
  %v535 = vld [vmem:[%s533 + $0x8] sm:$0xff]
  %v536 = vld [vmem:[%s533 + $0x10] sm:$0xff]
  %v537 = vld [vmem:[%s533 + $0x18] sm:$0xff]
  %v538 = vld [vmem:[%s533 + $0x20] sm:$0xff]
  %v539 = vld [vmem:[%s533 + $0x28] sm:$0xff]
  %v540 = vld [vmem:[%s533 + $0x30] sm:$0xff]
  %v541 = vld [vmem:[%s533 + $0x38] sm:$0xff]
  %v543 = vsel %vm303, %v529, 0
  %v546 = vsel %vm303, %v530, 0
  %v549 = vsel %vm303, %v531, 0
  %v552 = vsel %vm303, %v532, 0
  %554 = vmatprep.subr.mxu0 0.0
  %555 = vmatpush1.msra.mxu0 %v534
  %556 = vmatprep.subr.mxu0 0.0
  %557 = vmatpush1.msra.mxu0 %v535
  %558 = vmatprep.subr.mxu0 0.0
  %559 = vmatpush1.msra.mxu0 %v536
  %560 = vmatprep.subr.mxu0 0.0
  %561 = vmatpush1.msra.mxu0 %v537
  %562 = vmatprep.subr.mxu0 0.0
  %563 = vmatpush1.msra.mxu0 %v538
  %564 = vmatprep.subr.mxu0 0.0
  %565 = vmatpush1.msra.mxu0 %v539
  %566 = vmatprep.subr.mxu0 0.0
  %567 = vmatpush1.msra.mxu0 %v540
  %568 = vmatprep.subr.mxu0 0.0
  %569 = vmatpush1.msra.mxu0 %v541
  %570 = vmatprep.subr.mxu0 0.0
  %571 = vmatpush1.msra.mxu0 0.0
  %572 = vmatprep.subr.mxu0 0.0
  %573 = vmatpush1.msra.mxu0 0.0
  %574 = vmatprep.subr.mxu0 0.0
  %575 = vmatpush1.msra.mxu0 0.0
  %576 = vmatprep.subr.mxu0 0.0
  %577 = vmatpush1.msra.mxu0 0.0
  %578 = vmatprep.subr.mxu0 0.0
  %579 = vmatpush1.msra.mxu0 0.0
  %580 = vmatprep.subr.mxu0 0.0
  %581 = vmatpush1.msra.mxu0 0.0
  %582 = vmatprep.subr.mxu0 0.0
  %583 = vmatpush1.msra.mxu0 0.0
  %584 = vmatprep.subr.mxu0 0.0
  %585 = vmatpush1.msra.mxu0 0.0
  %586 = vmatprep.subr.mxu0 0.0
  %587 = vmatpush1.msra.mxu0 0.0
  %588 = vmatprep.subr.mxu0 0.0
  %589 = vmatpush1.msra.mxu0 0.0
  %590 = vmatprep.subr.mxu0 0.0
  %591 = vmatpush1.msra.mxu0 0.0
  %592 = vmatprep.subr.mxu0 0.0
  %593 = vmatpush1.msra.mxu0 0.0
  %594 = vmatprep.subr.mxu0 0.0
  %595 = vmatpush1.msra.mxu0 0.0
  %596 = vmatprep.subr.mxu0 0.0
  %597 = vmatpush1.msra.mxu0 0.0
  %598 = vmatprep.subr.mxu0 0.0
  %599 = vmatpush1.msra.mxu0 0.0
  %600 = vmatprep.subr.mxu0 0.0
  %601 = vmatpush1.msra.mxu0 0.0
  %602 = vmatprep.subr.mxu0 0.0
  %603 = vmatpush1.msra.mxu0 0.0
  %604 = vmatprep.subr.mxu0 0.0
  %605 = vmatpush1.msra.mxu0 0.0
  %606 = vmatprep.subr.mxu0 0.0
  %607 = vmatpush1.msra.mxu0 0.0
  %608 = vmatprep.subr.mxu0 0.0
  %609 = vmatpush1.msra.mxu0 0.0
  %610 = vmatprep.subr.mxu0 0.0
  %611 = vmatpush1.msra.mxu0 0.0
  %612 = vmatprep.subr.mxu0 0.0
  %613 = vmatpush1.msra.mxu0 0.0
  %614 = vmatprep.subr.mxu0 0.0
  %615 = vmatpush1.msra.mxu0 0.0
  %616 = vmatprep.subr.mxu0 0.0
  %617 = vmatpush1.msra.mxu0 0.0
  %618 = vmatprep.mubr.f32.mxu0 0.0
  %619 = vmatmul.mubr.f32.gmra.mrb[0].mxu0 %v543
  %v620 = vpop.f32.mrb[0].mxu0
  %v621 = vadd.f32 0.0, %v620
  %v622 = vpop.f32.mrb[0].mxu0
  %623 = vmatprep.mubr.f32.mxu0 0.0
  %624 = vmatmul.mubr.f32.gmra.mrb[0].mxu0 %v546
  %v625 = vpop.f32.mrb[0].mxu0
  %v626 = vadd.f32 0.0, %v625
  %v627 = vpop.f32.mrb[0].mxu0
  %628 = vmatprep.mubr.f32.mxu0 0.0
  %629 = vmatmul.mubr.f32.gmra.mrb[0].mxu0 %v549
  %v630 = vpop.f32.mrb[0].mxu0
  %v631 = vadd.f32 0.0, %v630
  %v632 = vpop.f32.mrb[0].mxu0
  %633 = vmatprep.mubr.f32.mxu0 0.0
  %634 = vmatmul.mubr.f32.gmra.mrb[0].mxu0 %v552
  %v635 = vpop.f32.mrb[0].mxu0
  %v636 = vadd.f32 0.0, %v635
  %v637 = vpop.f32.mrb[0].mxu0
  %638 = vdwg.mxu0
  %v639 = vadd.f32 %v511, %v621
  %v640 = vadd.f32 %v516, %v626
  %v641 = vadd.f32 %v521, %v631
  %v642 = vadd.f32 %v526, %v636
  %v643 = vadd.f32 %v639, %v640
  %v644 = vadd.f32 %v643, %v641
  %v645 = vadd.f32 %v644, %v642
  %v646 = vrot.slane %v645, 4
  %v647 = vadd.f32 %v645, %v646
  %v648 = vrot.slane %v647, 2
  %v649 = vadd.f32 %v647, %v648
  %v650 = vrot.slane %v649, 1
  %v651 = vadd.f32 %v649, %v650
  %v652 = vmul.f32 %v639, %v639
  %v653 = vmul.f32 %v640, %v640
  %v654 = vmul.f32 %v641, %v641
  %v655 = vmul.f32 %v642, %v642
  %v656 = vadd.f32 %v652, %v653
  %v657 = vadd.f32 %v656, %v654
  %v658 = vadd.f32 %v657, %v655
  %v659 = vrot.slane %v658, 4
  %v660 = vadd.f32 %v658, %v659
  %v661 = vrot.slane %v660, 2
  %v662 = vadd.f32 %v660, %v661
  %v663 = vrot.slane %v662, 1
  %v664 = vadd.f32 %v662, %v663
  %665 = vmatprep.subr.mxu0 0.0
  %666 = vmatpush1.msra.mxu0 %v278
  %667 = vmatprep.subr.mxu0 0.0
  %668 = vmatpush1.msra.mxu0 %v279
  %669 = vmatprep.subr.mxu0 0.0
  %670 = vmatpush1.msra.mxu0 %v280
  %671 = vmatprep.subr.mxu0 0.0
  %672 = vmatpush1.msra.mxu0 %v281
  %673 = vmatprep.subr.mxu0 0.0
  %674 = vmatpush1.msra.mxu0 %v282
  %675 = vmatprep.subr.mxu0 0.0
  %676 = vmatpush1.msra.mxu0 %v283
  %677 = vmatprep.subr.mxu0 0.0
  %678 = vmatpush1.msra.mxu0 %v284
  %679 = vmatprep.subr.mxu0 0.0
  %680 = vmatpush1.msra.mxu0 %v285
  %681 = vmatprep.subr.mxu0 0.0
  %682 = vmatpush1.msra.mxu0 %v286
  %683 = vmatprep.subr.mxu0 0.0
  %684 = vmatpush1.msra.mxu0 %v287
  %685 = vmatprep.subr.mxu0 0.0
  %686 = vmatpush1.msra.mxu0 %v288
  %687 = vmatprep.subr.mxu0 0.0
  %688 = vmatpush1.msra.mxu0 %v289
  %689 = vmatprep.subr.mxu0 0.0
  %690 = vmatpush1.msra.mxu0 %v290
  %691 = vmatprep.subr.mxu0 0.0
  %692 = vmatpush1.msra.mxu0 %v291
  %693 = vmatprep.subr.mxu0 0.0
  %694 = vmatpush1.msra.mxu0 %v292
  %695 = vmatprep.subr.mxu0 0.0
  %696 = vmatpush1.msra.mxu0 %v293
  %697 = vmatprep.subr.mxu0 0.0
  %698 = vmatpush1.msra.mxu0 0.0
  %699 = vmatprep.subr.mxu0 0.0
  %700 = vmatpush1.msra.mxu0 0.0
  %701 = vmatprep.subr.mxu0 0.0
  %702 = vmatpush1.msra.mxu0 0.0
  %703 = vmatprep.subr.mxu0 0.0
  %704 = vmatpush1.msra.mxu0 0.0
  %705 = vmatprep.subr.mxu0 0.0
  %706 = vmatpush1.msra.mxu0 0.0
  %707 = vmatprep.subr.mxu0 0.0
  %708 = vmatpush1.msra.mxu0 0.0
  %709 = vmatprep.subr.mxu0 0.0
  %710 = vmatpush1.msra.mxu0 0.0
  %711 = vmatprep.subr.mxu0 0.0
  %712 = vmatpush1.msra.mxu0 0.0
  %713 = vmatprep.subr.mxu0 0.0
  %714 = vmatpush1.msra.mxu0 0.0
  %715 = vmatprep.subr.mxu0 0.0
  %716 = vmatpush1.msra.mxu0 0.0
  %717 = vmatprep.subr.mxu0 0.0
  %718 = vmatpush1.msra.mxu0 0.0
  %719 = vmatprep.subr.mxu0 0.0
  %720 = vmatpush1.msra.mxu0 0.0
  %721 = vmatprep.subr.mxu0 0.0
  %722 = vmatpush1.msra.mxu0 0.0
  %723 = vmatprep.subr.mxu0 0.0
  %724 = vmatpush1.msra.mxu0 0.0
  %725 = vmatprep.subr.mxu0 0.0
  %726 = vmatpush1.msra.mxu0 0.0
  %727 = vmatprep.subr.mxu0 0.0
  %728 = vmatpush1.msra.mxu0 0.0
  %729 = vmatprep.mubr.f32.mxu0 0.0
  %730 = vmatmul.mubr.f32.gmra.mrb[0].mxu0 %v651
  %v731 = vpop.f32.mrb[0].mxu0
  %v732 = vadd.f32 0.0, %v731
  %v733 = vpop.f32.mrb[0].mxu0
  %734 = vdwg.mxu0
  %v735 = vmul.f32 %v732, 0.001953125
  %736 = vmatprep.subr.mxu0 0.0
  %737 = vmatpush1.msra.mxu0 %v278
  %738 = vmatprep.subr.mxu0 0.0
  %739 = vmatpush1.msra.mxu0 %v279
  %740 = vmatprep.subr.mxu0 0.0
  %741 = vmatpush1.msra.mxu0 %v280
  %742 = vmatprep.subr.mxu0 0.0
  %743 = vmatpush1.msra.mxu0 %v281
  %744 = vmatprep.subr.mxu0 0.0
  %745 = vmatpush1.msra.mxu0 %v282
  %746 = vmatprep.subr.mxu0 0.0
  %747 = vmatpush1.msra.mxu0 %v283
  %748 = vmatprep.subr.mxu0 0.0
  %749 = vmatpush1.msra.mxu0 %v284
  %750 = vmatprep.subr.mxu0 0.0
  %751 = vmatpush1.msra.mxu0 %v285
  %752 = vmatprep.subr.mxu0 0.0
  %753 = vmatpush1.msra.mxu0 %v286
  %754 = vmatprep.subr.mxu0 0.0
  %755 = vmatpush1.msra.mxu0 %v287
  %756 = vmatprep.subr.mxu0 0.0
  %757 = vmatpush1.msra.mxu0 %v288
  %758 = vmatprep.subr.mxu0 0.0
  %759 = vmatpush1.msra.mxu0 %v289
  %760 = vmatprep.subr.mxu0 0.0
  %761 = vmatpush1.msra.mxu0 %v290
  %762 = vmatprep.subr.mxu0 0.0
  %763 = vmatpush1.msra.mxu0 %v291
  %764 = vmatprep.subr.mxu0 0.0
  %765 = vmatpush1.msra.mxu0 %v292
  %766 = vmatprep.subr.mxu0 0.0
  %767 = vmatpush1.msra.mxu0 %v293
  %768 = vmatprep.subr.mxu0 0.0
  %769 = vmatpush1.msra.mxu0 0.0
  %770 = vmatprep.subr.mxu0 0.0
  %771 = vmatpush1.msra.mxu0 0.0
  %772 = vmatprep.subr.mxu0 0.0
  %773 = vmatpush1.msra.mxu0 0.0
  %774 = vmatprep.subr.mxu0 0.0
  %775 = vmatpush1.msra.mxu0 0.0
  %776 = vmatprep.subr.mxu0 0.0
  %777 = vmatpush1.msra.mxu0 0.0
  %778 = vmatprep.subr.mxu0 0.0
  %779 = vmatpush1.msra.mxu0 0.0
  %780 = vmatprep.subr.mxu0 0.0
  %781 = vmatpush1.msra.mxu0 0.0
  %782 = vmatprep.subr.mxu0 0.0
  %783 = vmatpush1.msra.mxu0 0.0
  %784 = vmatprep.subr.mxu0 0.0
  %785 = vmatpush1.msra.mxu0 0.0
  %786 = vmatprep.subr.mxu0 0.0
  %787 = vmatpush1.msra.mxu0 0.0
  %788 = vmatprep.subr.mxu0 0.0
  %789 = vmatpush1.msra.mxu0 0.0
  %790 = vmatprep.subr.mxu0 0.0
  %791 = vmatpush1.msra.mxu0 0.0
  %792 = vmatprep.subr.mxu0 0.0
  %793 = vmatpush1.msra.mxu0 0.0
  %794 = vmatprep.subr.mxu0 0.0
  %795 = vmatpush1.msra.mxu0 0.0
  %796 = vmatprep.subr.mxu0 0.0
  %797 = vmatpush1.msra.mxu0 0.0
  %798 = vmatprep.subr.mxu0 0.0
  %799 = vmatpush1.msra.mxu0 0.0
  %800 = vmatprep.mubr.f32.mxu0 0.0
  %801 = vmatmul.mubr.f32.gmra.mrb[0].mxu0 %v664
  %v802 = vpop.f32.mrb[0].mxu0
  %v803 = vadd.f32 0.0, %v802
  %v804 = vpop.f32.mrb[0].mxu0
  %805 = vdwg.mxu0
  %v806 = vmul.f32 %v803, 0.001953125
  %v807 = vmul.f32 %v735, %v735
  %v808 = vsub.f32 %v806, %v807
  %v809 = vadd.f32 %v808, 1e-05
  %v810 = vrsqrt.pop %v809
  %v811 = vmul.f32 %v308, %v810
  %v812 = vmul.f32 %v735, %v811
  %v813 = vsub.f32 %v309, %v812
  %vm814 = vcmask 64512
  %v816 = vsel %vm814, %v811, 0
  %818 = vmatprep.subr.mxu0 0.0
  %819 = vmatpush1.msra.mxu0 %v38
  %820 = vmatprep.subr.mxu0 0.0
  %821 = vmatpush1.msra.mxu0 0.0
  %822 = vmatprep.subr.mxu0 0.0
  %823 = vmatpush1.msra.mxu0 0.0
  %824 = vmatprep.subr.mxu0 0.0
  %825 = vmatpush1.msra.mxu0 0.0
  %826 = vmatprep.subr.mxu0 0.0
  %827 = vmatpush1.msra.mxu0 0.0
  %828 = vmatprep.subr.mxu0 0.0
  %829 = vmatpush1.msra.mxu0 0.0
  %830 = vmatprep.subr.mxu0 0.0
  %831 = vmatpush1.msra.mxu0 0.0
  %832 = vmatprep.subr.mxu0 0.0
  %833 = vmatpush1.msra.mxu0 0.0
  %834 = vmatprep.subr.mxu0 0.0
  %835 = vmatpush1.msra.mxu0 0.0
  %836 = vmatprep.subr.mxu0 0.0
  %837 = vmatpush1.msra.mxu0 0.0
  %838 = vmatprep.subr.mxu0 0.0
  %839 = vmatpush1.msra.mxu0 0.0
  %840 = vmatprep.subr.mxu0 0.0
  %841 = vmatpush1.msra.mxu0 0.0
  %842 = vmatprep.subr.mxu0 0.0
  %843 = vmatpush1.msra.mxu0 0.0
  %844 = vmatprep.subr.mxu0 0.0
  %845 = vmatpush1.msra.mxu0 0.0
  %846 = vmatprep.subr.mxu0 0.0
  %847 = vmatpush1.msra.mxu0 0.0
  %848 = vmatprep.subr.mxu0 0.0
  %849 = vmatpush1.msra.mxu0 0.0
  %850 = vmatprep.subr.mxu0 0.0
  %851 = vmatpush1.msra.mxu0 0.0
  %852 = vmatprep.subr.mxu0 0.0
  %853 = vmatpush1.msra.mxu0 0.0
  %854 = vmatprep.subr.mxu0 0.0
  %855 = vmatpush1.msra.mxu0 0.0
  %856 = vmatprep.subr.mxu0 0.0
  %857 = vmatpush1.msra.mxu0 0.0
  %858 = vmatprep.subr.mxu0 0.0
  %859 = vmatpush1.msra.mxu0 0.0
  %860 = vmatprep.subr.mxu0 0.0
  %861 = vmatpush1.msra.mxu0 0.0
  %862 = vmatprep.subr.mxu0 0.0
  %863 = vmatpush1.msra.mxu0 0.0
  %864 = vmatprep.subr.mxu0 0.0
  %865 = vmatpush1.msra.mxu0 0.0
  %866 = vmatprep.subr.mxu0 0.0
  %867 = vmatpush1.msra.mxu0 0.0
  %868 = vmatprep.subr.mxu0 0.0
  %869 = vmatpush1.msra.mxu0 0.0
  %870 = vmatprep.subr.mxu0 0.0
  %871 = vmatpush1.msra.mxu0 0.0
  %872 = vmatprep.subr.mxu0 0.0
  %873 = vmatpush1.msra.mxu0 0.0
  %874 = vmatprep.subr.mxu0 0.0
  %875 = vmatpush1.msra.mxu0 0.0
  %876 = vmatprep.subr.mxu0 0.0
  %877 = vmatpush1.msra.mxu0 0.0
  %878 = vmatprep.subr.mxu0 0.0
  %879 = vmatpush1.msra.mxu0 0.0
  %880 = vmatprep.subr.mxu0 0.0
  %881 = vmatpush1.msra.mxu0 0.0
  %882 = vmatprep.mubr.f32.mxu0 0.0
  %883 = vmatmul.mubr.f32.gmra.mrb[0].mxu0 %v816
  %v884 = vpop.f32.mrb[0].mxu0
  %v885 = vadd.f32 0.0, %v884
  %v886 = vpop.f32.mrb[0].mxu0
  %887 = vdwg.mxu0
  %v889 = vsel %vm814, %v813, 0
  %891 = vmatprep.subr.mxu0 0.0
  %892 = vmatpush1.msra.mxu0 %v38
  %893 = vmatprep.subr.mxu0 0.0
  %894 = vmatpush1.msra.mxu0 0.0
  %895 = vmatprep.subr.mxu0 0.0
  %896 = vmatpush1.msra.mxu0 0.0
  %897 = vmatprep.subr.mxu0 0.0
  %898 = vmatpush1.msra.mxu0 0.0
  %899 = vmatprep.subr.mxu0 0.0
  %900 = vmatpush1.msra.mxu0 0.0
  %901 = vmatprep.subr.mxu0 0.0
  %902 = vmatpush1.msra.mxu0 0.0
  %903 = vmatprep.subr.mxu0 0.0
  %904 = vmatpush1.msra.mxu0 0.0
  %905 = vmatprep.subr.mxu0 0.0
  %906 = vmatpush1.msra.mxu0 0.0
  %907 = vmatprep.subr.mxu0 0.0
  %908 = vmatpush1.msra.mxu0 0.0
  %909 = vmatprep.subr.mxu0 0.0
  %910 = vmatpush1.msra.mxu0 0.0
  %911 = vmatprep.subr.mxu0 0.0
  %912 = vmatpush1.msra.mxu0 0.0
  %913 = vmatprep.subr.mxu0 0.0
  %914 = vmatpush1.msra.mxu0 0.0
  %915 = vmatprep.subr.mxu0 0.0
  %916 = vmatpush1.msra.mxu0 0.0
  %917 = vmatprep.subr.mxu0 0.0
  %918 = vmatpush1.msra.mxu0 0.0
  %919 = vmatprep.subr.mxu0 0.0
  %920 = vmatpush1.msra.mxu0 0.0
  %921 = vmatprep.subr.mxu0 0.0
  %922 = vmatpush1.msra.mxu0 0.0
  %923 = vmatprep.subr.mxu0 0.0
  %924 = vmatpush1.msra.mxu0 0.0
  %925 = vmatprep.subr.mxu0 0.0
  %926 = vmatpush1.msra.mxu0 0.0
  %927 = vmatprep.subr.mxu0 0.0
  %928 = vmatpush1.msra.mxu0 0.0
  %929 = vmatprep.subr.mxu0 0.0
  %930 = vmatpush1.msra.mxu0 0.0
  %931 = vmatprep.subr.mxu0 0.0
  %932 = vmatpush1.msra.mxu0 0.0
  %933 = vmatprep.subr.mxu0 0.0
  %934 = vmatpush1.msra.mxu0 0.0
  %935 = vmatprep.subr.mxu0 0.0
  %936 = vmatpush1.msra.mxu0 0.0
  %937 = vmatprep.subr.mxu0 0.0
  %938 = vmatpush1.msra.mxu0 0.0
  %939 = vmatprep.subr.mxu0 0.0
  %940 = vmatpush1.msra.mxu0 0.0
  %941 = vmatprep.subr.mxu0 0.0
  %942 = vmatpush1.msra.mxu0 0.0
  %943 = vmatprep.subr.mxu0 0.0
  %944 = vmatpush1.msra.mxu0 0.0
  %945 = vmatprep.subr.mxu0 0.0
  %946 = vmatpush1.msra.mxu0 0.0
  %947 = vmatprep.subr.mxu0 0.0
  %948 = vmatpush1.msra.mxu0 0.0
  %949 = vmatprep.subr.mxu0 0.0
  %950 = vmatpush1.msra.mxu0 0.0
  %951 = vmatprep.subr.mxu0 0.0
  %952 = vmatpush1.msra.mxu0 0.0
  %953 = vmatprep.subr.mxu0 0.0
  %954 = vmatpush1.msra.mxu0 0.0
  %955 = vmatprep.mubr.f32.mxu0 0.0
  %956 = vmatmul.mubr.f32.gmra.mrb[0].mxu0 %v889
  %v957 = vpop.f32.mrb[0].mxu0
  %v958 = vadd.f32 0.0, %v957
  %v959 = vpop.f32.mrb[0].mxu0
  %960 = vdwg.mxu0
  %v961 = vlaneseq
  %v962 = vshrl.u32 %v961, 7
  %v963 = vsub.s32 0, %v962
  %v964 = vrot.slane %v885, %v963
  %v965 = vmul.f32 %v639, %v964
  %v966 = vmul.f32 %v640, %v964
  %v967 = vmul.f32 %v641, %v964
  %v968 = vmul.f32 %v642, %v964
  %v969 = vlaneseq
  %v970 = vshrl.u32 %v969, 7
  %v971 = vsub.s32 0, %v970
  %v972 = vrot.slane %v958, %v971
  %v973 = vadd.f32 %v965, %v972
  %v974 = vadd.f32 %v966, %v972
  %v975 = vadd.f32 %v967, %v972
  %v976 = vadd.f32 %v968, %v972
  %v977 = vmax.f32 %v973, 0.0
  %v978 = vmax.f32 %v974, 0.0
  %v979 = vmax.f32 %v975, 0.0
  %v980 = vmax.f32 %v976, 0.0
  %981 = vst [vmem:[#allocation3] sm:$0x1] 0.0
  %982 = vst [vmem:[#allocation3 + $0x18] sm:$0x1] 0.0
  %983 = vst [vmem:[#allocation3 + $0x11] sm:$0x1] 0.0
  %984 = vst [vmem:[#allocation3 + $0x29] sm:$0x1] 0.0
  %985 = vst [vmem:[#allocation3 + $0x1] sm:$0xff] %v977
  %986 = vst [vmem:[#allocation3 + $0x9] sm:$0xff] %v978
  %987 = vst [vmem:[#allocation3 + $0x19] sm:$0xff] %v979
  %988 = vst [vmem:[#allocation3 + $0x21] sm:$0xff] %v980
  %v989 = vld [vmem:[%s4 + $0x2] ss:$0 sm:$0xff]
  %v990 = vld [vmem:[%s4 + $0x3] ss:$0 sm:$0xff]
  %v991 = vld [vmem:[#allocation3] sm:$0xff]
  %v992 = vld [vmem:[#allocation3 + $0x8] sm:$0xff]
  %v993 = vld [vmem:[#allocation3 + $0x18] sm:$0xff]
  %v994 = vld [vmem:[#allocation3 + $0x20] sm:$0xff]
  %v995 = vld [vmem:[%s2] sm:$0xff]
  %v996 = vld [vmem:[%s2 + $0x8] sm:$0xff]
  %v997 = vld [vmem:[%s2 + $0x10] sm:$0xff]
  %v998 = vld [vmem:[%s2 + $0x18] sm:$0xff]
  %v999 = vld [vmem:[%s2 + $0x20] sm:$0xff]
  %v1000 = vld [vmem:[%s2 + $0x28] sm:$0xff]
  %v1001 = vld [vmem:[%s2 + $0x30] sm:$0xff]
  %v1002 = vld [vmem:[%s2 + $0x38] sm:$0xff]
  %v1003 = vld [vmem:[%s2 + $0x40] sm:$0xff]
  %v1004 = vld [vmem:[%s2 + $0x48] sm:$0xff]
  %v1005 = vld [vmem:[%s2 + $0x50] sm:$0xff]
  %v1006 = vld [vmem:[%s2 + $0x58] sm:$0xff]
  %v1007 = vld [vmem:[%s2 + $0x60] sm:$0xff]
  %v1008 = vld [vmem:[%s2 + $0x68] sm:$0xff]
  %v1009 = vld [vmem:[%s2 + $0x70] sm:$0xff]
  %v1010 = vld [vmem:[%s2 + $0x78] sm:$0xff]
  %v1011 = vld [vmem:[#allocation3 + $0x1] sm:$0xff]
  %v1012 = vld [vmem:[#allocation3 + $0x9] sm:$0xff]
  %v1013 = vld [vmem:[#allocation3 + $0x19] sm:$0xff]
  %v1014 = vld [vmem:[#allocation3 + $0x21] sm:$0xff]
  %s1015 = scalar_lea.vmem %s2, 128
  %v1016 = vld [vmem:[%s1015] sm:$0xff]
  %v1017 = vld [vmem:[%s1015 + $0x8] sm:$0xff]
  %v1018 = vld [vmem:[%s1015 + $0x10] sm:$0xff]
  %v1019 = vld [vmem:[%s1015 + $0x18] sm:$0xff]
  %v1020 = vld [vmem:[%s1015 + $0x20] sm:$0xff]
  %v1021 = vld [vmem:[%s1015 + $0x28] sm:$0xff]
  %v1022 = vld [vmem:[%s1015 + $0x30] sm:$0xff]
  %v1023 = vld [vmem:[%s1015 + $0x38] sm:$0xff]
  %v1024 = vld [vmem:[%s1015 + $0x40] sm:$0xff]
  %v1025 = vld [vmem:[%s1015 + $0x48] sm:$0xff]
  %v1026 = vld [vmem:[%s1015 + $0x50] sm:$0xff]
  %v1027 = vld [vmem:[%s1015 + $0x58] sm:$0xff]
  %v1028 = vld [vmem:[%s1015 + $0x60] sm:$0xff]
  %v1029 = vld [vmem:[%s1015 + $0x68] sm:$0xff]
  %v1030 = vld [vmem:[%s1015 + $0x70] sm:$0xff]
  %v1031 = vld [vmem:[%s1015 + $0x78] sm:$0xff]
  %1032 = vmatprep.subr.mxu0 0.0
  %1033 = vmatpush1.msra.mxu0 %v1016
  %1034 = vmatprep.subr.mxu0 0.0
  %1035 = vmatpush1.msra.mxu0 %v1017
  %1036 = vmatprep.subr.mxu0 0.0
  %1037 = vmatpush1.msra.mxu0 %v1018
  %1038 = vmatprep.subr.mxu0 0.0
  %1039 = vmatpush1.msra.mxu0 %v1019
  %1040 = vmatprep.subr.mxu0 0.0
  %1041 = vmatpush1.msra.mxu0 %v1020
  %1042 = vmatprep.subr.mxu0 0.0
  %1043 = vmatpush1.msra.mxu0 %v1021
  %1044 = vmatprep.subr.mxu0 0.0
  %1045 = vmatpush1.msra.mxu0 %v1022
  %1046 = vmatprep.subr.mxu0 0.0
  %1047 = vmatpush1.msra.mxu0 %v1023
  %1048 = vmatprep.subr.mxu0 0.0
  %1049 = vmatpush1.msra.mxu0 %v1024
  %1050 = vmatprep.subr.mxu0 0.0
  %1051 = vmatpush1.msra.mxu0 %v1025
  %1052 = vmatprep.subr.mxu0 0.0
  %1053 = vmatpush1.msra.mxu0 %v1026
  %1054 = vmatprep.subr.mxu0 0.0
  %1055 = vmatpush1.msra.mxu0 %v1027
  %1056 = vmatprep.subr.mxu0 0.0
  %1057 = vmatpush1.msra.mxu0 %v1028
  %1058 = vmatprep.subr.mxu0 0.0
  %1059 = vmatpush1.msra.mxu0 %v1029
  %1060 = vmatprep.subr.mxu0 0.0
  %1061 = vmatpush1.msra.mxu0 %v1030
  %1062 = vmatprep.subr.mxu0 0.0
  %1063 = vmatpush1.msra.mxu0 %v1031
  %1064 = vmatprep.subr.mxu0 0.0
  %1065 = vmatpush1.msra.mxu0 0.0
  %1066 = vmatprep.subr.mxu0 0.0
  %1067 = vmatpush1.msra.mxu0 0.0
  %1068 = vmatprep.subr.mxu0 0.0
  %1069 = vmatpush1.msra.mxu0 0.0
  %1070 = vmatprep.subr.mxu0 0.0
  %1071 = vmatpush1.msra.mxu0 0.0
  %1072 = vmatprep.subr.mxu0 0.0
  %1073 = vmatpush1.msra.mxu0 0.0
  %1074 = vmatprep.subr.mxu0 0.0
  %1075 = vmatpush1.msra.mxu0 0.0
  %1076 = vmatprep.subr.mxu0 0.0
  %1077 = vmatpush1.msra.mxu0 0.0
  %1078 = vmatprep.subr.mxu0 0.0
  %1079 = vmatpush1.msra.mxu0 0.0
  %1080 = vmatprep.subr.mxu0 0.0
  %1081 = vmatpush1.msra.mxu0 0.0
  %1082 = vmatprep.subr.mxu0 0.0
  %1083 = vmatpush1.msra.mxu0 0.0
  %1084 = vmatprep.subr.mxu0 0.0
  %1085 = vmatpush1.msra.mxu0 0.0
  %1086 = vmatprep.subr.mxu0 0.0
  %1087 = vmatpush1.msra.mxu0 0.0
  %1088 = vmatprep.subr.mxu0 0.0
  %1089 = vmatpush1.msra.mxu0 0.0
  %1090 = vmatprep.subr.mxu0 0.0
  %1091 = vmatpush1.msra.mxu0 0.0
  %1092 = vmatprep.subr.mxu0 0.0
  %1093 = vmatpush1.msra.mxu0 0.0
  %1094 = vmatprep.subr.mxu0 0.0
  %1095 = vmatpush1.msra.mxu0 0.0
  %1096 = vmatprep.mubr.f32.mxu0 0.0
  %1097 = vmatmul.mubr.f32.gmra.mrb[0].mxu0 %v1011
  %v1098 = vpop.f32.mrb[0].mxu0
  %v1099 = vadd.f32 0.0, %v1098
  %v1100 = vpop.f32.mrb[0].mxu0
  %1101 = vmatprep.mubr.f32.mxu0 0.0
  %1102 = vmatmul.mubr.f32.gmra.mrb[0].mxu0 %v1012
  %v1103 = vpop.f32.mrb[0].mxu0
  %v1104 = vadd.f32 0.0, %v1103
  %v1105 = vpop.f32.mrb[0].mxu0
  %1106 = vmatprep.mubr.f32.mxu0 0.0
  %1107 = vmatmul.mubr.f32.gmra.mrb[0].mxu0 %v1013
  %v1108 = vpop.f32.mrb[0].mxu0
  %v1109 = vadd.f32 0.0, %v1108
  %v1110 = vpop.f32.mrb[0].mxu0
  %1111 = vmatprep.mubr.f32.mxu0 0.0
  %1112 = vmatmul.mubr.f32.gmra.mrb[0].mxu0 %v1014
  %v1113 = vpop.f32.mrb[0].mxu0
  %v1114 = vadd.f32 0.0, %v1113
  %v1115 = vpop.f32.mrb[0].mxu0
  %1116 = vdwg.mxu0
  %1117 = vmatprep.subr.mxu0 0.0
  %1118 = vmatpush1.msra.mxu0 %v995
  %1119 = vmatprep.subr.mxu0 0.0
  %1120 = vmatpush1.msra.mxu0 %v996
  %1121 = vmatprep.subr.mxu0 0.0
  %1122 = vmatpush1.msra.mxu0 %v997
  %1123 = vmatprep.subr.mxu0 0.0
  %1124 = vmatpush1.msra.mxu0 %v998
  %1125 = vmatprep.subr.mxu0 0.0
  %1126 = vmatpush1.msra.mxu0 %v999
  %1127 = vmatprep.subr.mxu0 0.0
  %1128 = vmatpush1.msra.mxu0 %v1000
  %1129 = vmatprep.subr.mxu0 0.0
  %1130 = vmatpush1.msra.mxu0 %v1001
  %1131 = vmatprep.subr.mxu0 0.0
  %1132 = vmatpush1.msra.mxu0 %v1002
  %1133 = vmatprep.subr.mxu0 0.0
  %1134 = vmatpush1.msra.mxu0 %v1003
  %1135 = vmatprep.subr.mxu0 0.0
  %1136 = vmatpush1.msra.mxu0 %v1004
  %1137 = vmatprep.subr.mxu0 0.0
  %1138 = vmatpush1.msra.mxu0 %v1005
  %1139 = vmatprep.subr.mxu0 0.0
  %1140 = vmatpush1.msra.mxu0 %v1006
  %1141 = vmatprep.subr.mxu0 0.0
  %1142 = vmatpush1.msra.mxu0 %v1007
  %1143 = vmatprep.subr.mxu0 0.0
  %1144 = vmatpush1.msra.mxu0 %v1008
  %1145 = vmatprep.subr.mxu0 0.0
  %1146 = vmatpush1.msra.mxu0 %v1009
  %1147 = vmatprep.subr.mxu0 0.0
  %1148 = vmatpush1.msra.mxu0 %v1010
  %1149 = vmatprep.subr.mxu0 0.0
  %1150 = vmatpush1.msra.mxu0 0.0
  %1151 = vmatprep.subr.mxu0 0.0
  %1152 = vmatpush1.msra.mxu0 0.0
  %1153 = vmatprep.subr.mxu0 0.0
  %1154 = vmatpush1.msra.mxu0 0.0
  %1155 = vmatprep.subr.mxu0 0.0
  %1156 = vmatpush1.msra.mxu0 0.0
  %1157 = vmatprep.subr.mxu0 0.0
  %1158 = vmatpush1.msra.mxu0 0.0
  %1159 = vmatprep.subr.mxu0 0.0
  %1160 = vmatpush1.msra.mxu0 0.0
  %1161 = vmatprep.subr.mxu0 0.0
  %1162 = vmatpush1.msra.mxu0 0.0
  %1163 = vmatprep.subr.mxu0 0.0
  %1164 = vmatpush1.msra.mxu0 0.0
  %1165 = vmatprep.subr.mxu0 0.0
  %1166 = vmatpush1.msra.mxu0 0.0
  %1167 = vmatprep.subr.mxu0 0.0
  %1168 = vmatpush1.msra.mxu0 0.0
  %1169 = vmatprep.subr.mxu0 0.0
  %1170 = vmatpush1.msra.mxu0 0.0
  %1171 = vmatprep.subr.mxu0 0.0
  %1172 = vmatpush1.msra.mxu0 0.0
  %1173 = vmatprep.subr.mxu0 0.0
  %1174 = vmatpush1.msra.mxu0 0.0
  %1175 = vmatprep.subr.mxu0 0.0
  %1176 = vmatpush1.msra.mxu0 0.0
  %1177 = vmatprep.subr.mxu0 0.0
  %1178 = vmatpush1.msra.mxu0 0.0
  %1179 = vmatprep.subr.mxu0 0.0
  %1180 = vmatpush1.msra.mxu0 0.0
  %1181 = vmatprep.mubr.f32.mxu0 0.0
  %1182 = vmatmul.mubr.f32.gmra.mrb[0].mxu0 %v991
  %v1183 = vpop.f32.mrb[0].mxu0
  %v1184 = vadd.f32 %v1099, %v1183
  %v1185 = vpop.f32.mrb[0].mxu0
  %1186 = vmatprep.mubr.f32.mxu0 0.0
  %1187 = vmatmul.mubr.f32.gmra.mrb[0].mxu0 %v992
  %v1188 = vpop.f32.mrb[0].mxu0
  %v1189 = vadd.f32 %v1104, %v1188
  %v1190 = vpop.f32.mrb[0].mxu0
  %1191 = vmatprep.mubr.f32.mxu0 0.0
  %1192 = vmatmul.mubr.f32.gmra.mrb[0].mxu0 %v993
  %v1193 = vpop.f32.mrb[0].mxu0
  %v1194 = vadd.f32 %v1109, %v1193
  %v1195 = vpop.f32.mrb[0].mxu0
  %1196 = vmatprep.mubr.f32.mxu0 0.0
  %1197 = vmatmul.mubr.f32.gmra.mrb[0].mxu0 %v994
  %v1198 = vpop.f32.mrb[0].mxu0
  %v1199 = vadd.f32 %v1114, %v1198
  %v1200 = vpop.f32.mrb[0].mxu0
  %1201 = vdwg.mxu0
  %v1202 = vld [vmem:[#allocation3 + $0x2] sm:$0xff]
  %v1203 = vld [vmem:[#allocation3 + $0xa] sm:$0xff]
  %v1204 = vld [vmem:[#allocation3 + $0x1a] sm:$0xff]
  %v1205 = vld [vmem:[#allocation3 + $0x22] sm:$0xff]
  %s1206 = scalar_lea.vmem %s2, 256
  %v1207 = vld [vmem:[%s1206] sm:$0xff]
  %v1208 = vld [vmem:[%s1206 + $0x8] sm:$0xff]
  %v1209 = vld [vmem:[%s1206 + $0x10] sm:$0xff]
  %v1210 = vld [vmem:[%s1206 + $0x18] sm:$0xff]
  %v1211 = vld [vmem:[%s1206 + $0x20] sm:$0xff]
  %v1212 = vld [vmem:[%s1206 + $0x28] sm:$0xff]
  %v1213 = vld [vmem:[%s1206 + $0x30] sm:$0xff]
  %v1214 = vld [vmem:[%s1206 + $0x38] sm:$0xff]
  %v1215 = vld [vmem:[%s1206 + $0x40] sm:$0xff]
  %v1216 = vld [vmem:[%s1206 + $0x48] sm:$0xff]
  %v1217 = vld [vmem:[%s1206 + $0x50] sm:$0xff]
  %v1218 = vld [vmem:[%s1206 + $0x58] sm:$0xff]
  %v1219 = vld [vmem:[%s1206 + $0x60] sm:$0xff]
  %v1220 = vld [vmem:[%s1206 + $0x68] sm:$0xff]
  %v1221 = vld [vmem:[%s1206 + $0x70] sm:$0xff]
  %v1222 = vld [vmem:[%s1206 + $0x78] sm:$0xff]
  %1223 = vmatprep.subr.mxu0 0.0
  %1224 = vmatpush1.msra.mxu0 %v1207
  %1225 = vmatprep.subr.mxu0 0.0
  %1226 = vmatpush1.msra.mxu0 %v1208
  %1227 = vmatprep.subr.mxu0 0.0
  %1228 = vmatpush1.msra.mxu0 %v1209
  %1229 = vmatprep.subr.mxu0 0.0
  %1230 = vmatpush1.msra.mxu0 %v1210
  %1231 = vmatprep.subr.mxu0 0.0
  %1232 = vmatpush1.msra.mxu0 %v1211
  %1233 = vmatprep.subr.mxu0 0.0
  %1234 = vmatpush1.msra.mxu0 %v1212
  %1235 = vmatprep.subr.mxu0 0.0
  %1236 = vmatpush1.msra.mxu0 %v1213
  %1237 = vmatprep.subr.mxu0 0.0
  %1238 = vmatpush1.msra.mxu0 %v1214
  %1239 = vmatprep.subr.mxu0 0.0
  %1240 = vmatpush1.msra.mxu0 %v1215
  %1241 = vmatprep.subr.mxu0 0.0
  %1242 = vmatpush1.msra.mxu0 %v1216
  %1243 = vmatprep.subr.mxu0 0.0
  %1244 = vmatpush1.msra.mxu0 %v1217
  %1245 = vmatprep.subr.mxu0 0.0
  %1246 = vmatpush1.msra.mxu0 %v1218
  %1247 = vmatprep.subr.mxu0 0.0
  %1248 = vmatpush1.msra.mxu0 %v1219
  %1249 = vmatprep.subr.mxu0 0.0
  %1250 = vmatpush1.msra.mxu0 %v1220
  %1251 = vmatprep.subr.mxu0 0.0
  %1252 = vmatpush1.msra.mxu0 %v1221
  %1253 = vmatprep.subr.mxu0 0.0
  %1254 = vmatpush1.msra.mxu0 %v1222
  %1255 = vmatprep.subr.mxu0 0.0
  %1256 = vmatpush1.msra.mxu0 0.0
  %1257 = vmatprep.subr.mxu0 0.0
  %1258 = vmatpush1.msra.mxu0 0.0
  %1259 = vmatprep.subr.mxu0 0.0
  %1260 = vmatpush1.msra.mxu0 0.0
  %1261 = vmatprep.subr.mxu0 0.0
  %1262 = vmatpush1.msra.mxu0 0.0
  %1263 = vmatprep.subr.mxu0 0.0
  %1264 = vmatpush1.msra.mxu0 0.0
  %1265 = vmatprep.subr.mxu0 0.0
  %1266 = vmatpush1.msra.mxu0 0.0
  %1267 = vmatprep.subr.mxu0 0.0
  %1268 = vmatpush1.msra.mxu0 0.0
  %1269 = vmatprep.subr.mxu0 0.0
  %1270 = vmatpush1.msra.mxu0 0.0
  %1271 = vmatprep.subr.mxu0 0.0
  %1272 = vmatpush1.msra.mxu0 0.0
  %1273 = vmatprep.subr.mxu0 0.0
  %1274 = vmatpush1.msra.mxu0 0.0
  %1275 = vmatprep.subr.mxu0 0.0
  %1276 = vmatpush1.msra.mxu0 0.0
  %1277 = vmatprep.subr.mxu0 0.0
  %1278 = vmatpush1.msra.mxu0 0.0
  %1279 = vmatprep.subr.mxu0 0.0
  %1280 = vmatpush1.msra.mxu0 0.0
  %1281 = vmatprep.subr.mxu0 0.0
  %1282 = vmatpush1.msra.mxu0 0.0
  %1283 = vmatprep.subr.mxu0 0.0
  %1284 = vmatpush1.msra.mxu0 0.0
  %1285 = vmatprep.subr.mxu0 0.0
  %1286 = vmatpush1.msra.mxu0 0.0
  %1287 = vmatprep.mubr.f32.mxu0 0.0
  %1288 = vmatmul.mubr.f32.gmra.mrb[0].mxu0 %v1202
  %v1289 = vpop.f32.mrb[0].mxu0
  %v1290 = vadd.f32 0.0, %v1289
  %v1291 = vpop.f32.mrb[0].mxu0
  %1292 = vmatprep.mubr.f32.mxu0 0.0
  %1293 = vmatmul.mubr.f32.gmra.mrb[0].mxu0 %v1203
  %v1294 = vpop.f32.mrb[0].mxu0
  %v1295 = vadd.f32 0.0, %v1294
  %v1296 = vpop.f32.mrb[0].mxu0
  %1297 = vmatprep.mubr.f32.mxu0 0.0
  %1298 = vmatmul.mubr.f32.gmra.mrb[0].mxu0 %v1204
  %v1299 = vpop.f32.mrb[0].mxu0
  %v1300 = vadd.f32 0.0, %v1299
  %v1301 = vpop.f32.mrb[0].mxu0
  %1302 = vmatprep.mubr.f32.mxu0 0.0
  %1303 = vmatmul.mubr.f32.gmra.mrb[0].mxu0 %v1205
  %v1304 = vpop.f32.mrb[0].mxu0
  %v1305 = vadd.f32 0.0, %v1304
  %v1306 = vpop.f32.mrb[0].mxu0
  %1307 = vdwg.mxu0
  %v1308 = vadd.f32 %v1184, %v1290
  %v1309 = vadd.f32 %v1189, %v1295
  %v1310 = vadd.f32 %v1194, %v1300
  %v1311 = vadd.f32 %v1199, %v1305
  %v1312 = vadd.f32 %v1308, %v1309
  %v1313 = vadd.f32 %v1312, %v1310
  %v1314 = vadd.f32 %v1313, %v1311
  %v1315 = vrot.slane %v1314, 4
  %v1316 = vadd.f32 %v1314, %v1315
  %v1317 = vrot.slane %v1316, 2
  %v1318 = vadd.f32 %v1316, %v1317
  %v1319 = vrot.slane %v1318, 1
  %v1320 = vadd.f32 %v1318, %v1319
  %v1321 = vmul.f32 %v1308, %v1308
  %v1322 = vmul.f32 %v1309, %v1309
  %v1323 = vmul.f32 %v1310, %v1310
  %v1324 = vmul.f32 %v1311, %v1311
  %v1325 = vadd.f32 %v1321, %v1322
  %v1326 = vadd.f32 %v1325, %v1323
  %v1327 = vadd.f32 %v1326, %v1324
  %v1328 = vrot.slane %v1327, 4
  %v1329 = vadd.f32 %v1327, %v1328
  %v1330 = vrot.slane %v1329, 2
  %v1331 = vadd.f32 %v1329, %v1330
  %v1332 = vrot.slane %v1331, 1
  %v1333 = vadd.f32 %v1331, %v1332
  %1334 = vmatprep.subr.mxu0 0.0
  %1335 = vmatpush1.msra.mxu0 %v278
  %1336 = vmatprep.subr.mxu0 0.0
  %1337 = vmatpush1.msra.mxu0 %v279
  %1338 = vmatprep.subr.mxu0 0.0
  %1339 = vmatpush1.msra.mxu0 %v280
  %1340 = vmatprep.subr.mxu0 0.0
  %1341 = vmatpush1.msra.mxu0 %v281
  %1342 = vmatprep.subr.mxu0 0.0
  %1343 = vmatpush1.msra.mxu0 %v282
  %1344 = vmatprep.subr.mxu0 0.0
  %1345 = vmatpush1.msra.mxu0 %v283
  %1346 = vmatprep.subr.mxu0 0.0
  %1347 = vmatpush1.msra.mxu0 %v284
  %1348 = vmatprep.subr.mxu0 0.0
  %1349 = vmatpush1.msra.mxu0 %v285
  %1350 = vmatprep.subr.mxu0 0.0
  %1351 = vmatpush1.msra.mxu0 %v286
  %1352 = vmatprep.subr.mxu0 0.0
  %1353 = vmatpush1.msra.mxu0 %v287
  %1354 = vmatprep.subr.mxu0 0.0
  %1355 = vmatpush1.msra.mxu0 %v288
  %1356 = vmatprep.subr.mxu0 0.0
  %1357 = vmatpush1.msra.mxu0 %v289
  %1358 = vmatprep.subr.mxu0 0.0
  %1359 = vmatpush1.msra.mxu0 %v290
  %1360 = vmatprep.subr.mxu0 0.0
  %1361 = vmatpush1.msra.mxu0 %v291
  %1362 = vmatprep.subr.mxu0 0.0
  %1363 = vmatpush1.msra.mxu0 %v292
  %1364 = vmatprep.subr.mxu0 0.0
  %1365 = vmatpush1.msra.mxu0 %v293
  %1366 = vmatprep.subr.mxu0 0.0
  %1367 = vmatpush1.msra.mxu0 0.0
  %1368 = vmatprep.subr.mxu0 0.0
  %1369 = vmatpush1.msra.mxu0 0.0
  %1370 = vmatprep.subr.mxu0 0.0
  %1371 = vmatpush1.msra.mxu0 0.0
  %1372 = vmatprep.subr.mxu0 0.0
  %1373 = vmatpush1.msra.mxu0 0.0
  %1374 = vmatprep.subr.mxu0 0.0
  %1375 = vmatpush1.msra.mxu0 0.0
  %1376 = vmatprep.subr.mxu0 0.0
  %1377 = vmatpush1.msra.mxu0 0.0
  %1378 = vmatprep.subr.mxu0 0.0
  %1379 = vmatpush1.msra.mxu0 0.0
  %1380 = vmatprep.subr.mxu0 0.0
  %1381 = vmatpush1.msra.mxu0 0.0
  %1382 = vmatprep.subr.mxu0 0.0
  %1383 = vmatpush1.msra.mxu0 0.0
  %1384 = vmatprep.subr.mxu0 0.0
  %1385 = vmatpush1.msra.mxu0 0.0
  %1386 = vmatprep.subr.mxu0 0.0
  %1387 = vmatpush1.msra.mxu0 0.0
  %1388 = vmatprep.subr.mxu0 0.0
  %1389 = vmatpush1.msra.mxu0 0.0
  %1390 = vmatprep.subr.mxu0 0.0
  %1391 = vmatpush1.msra.mxu0 0.0
  %1392 = vmatprep.subr.mxu0 0.0
  %1393 = vmatpush1.msra.mxu0 0.0
  %1394 = vmatprep.subr.mxu0 0.0
  %1395 = vmatpush1.msra.mxu0 0.0
  %1396 = vmatprep.subr.mxu0 0.0
  %1397 = vmatpush1.msra.mxu0 0.0
  %1398 = vmatprep.mubr.f32.mxu0 0.0
  %1399 = vmatmul.mubr.f32.gmra.mrb[0].mxu0 %v1320
  %v1400 = vpop.f32.mrb[0].mxu0
  %v1401 = vadd.f32 0.0, %v1400
  %v1402 = vpop.f32.mrb[0].mxu0
  %1403 = vdwg.mxu0
  %v1404 = vmul.f32 %v1401, 0.001953125
  %1405 = vmatprep.subr.mxu0 0.0
  %1406 = vmatpush1.msra.mxu0 %v278
  %1407 = vmatprep.subr.mxu0 0.0
  %1408 = vmatpush1.msra.mxu0 %v279
  %1409 = vmatprep.subr.mxu0 0.0
  %1410 = vmatpush1.msra.mxu0 %v280
  %1411 = vmatprep.subr.mxu0 0.0
  %1412 = vmatpush1.msra.mxu0 %v281
  %1413 = vmatprep.subr.mxu0 0.0
  %1414 = vmatpush1.msra.mxu0 %v282
  %1415 = vmatprep.subr.mxu0 0.0
  %1416 = vmatpush1.msra.mxu0 %v283
  %1417 = vmatprep.subr.mxu0 0.0
  %1418 = vmatpush1.msra.mxu0 %v284
  %1419 = vmatprep.subr.mxu0 0.0
  %1420 = vmatpush1.msra.mxu0 %v285
  %1421 = vmatprep.subr.mxu0 0.0
  %1422 = vmatpush1.msra.mxu0 %v286
  %1423 = vmatprep.subr.mxu0 0.0
  %1424 = vmatpush1.msra.mxu0 %v287
  %1425 = vmatprep.subr.mxu0 0.0
  %1426 = vmatpush1.msra.mxu0 %v288
  %1427 = vmatprep.subr.mxu0 0.0
  %1428 = vmatpush1.msra.mxu0 %v289
  %1429 = vmatprep.subr.mxu0 0.0
  %1430 = vmatpush1.msra.mxu0 %v290
  %1431 = vmatprep.subr.mxu0 0.0
  %1432 = vmatpush1.msra.mxu0 %v291
  %1433 = vmatprep.subr.mxu0 0.0
  %1434 = vmatpush1.msra.mxu0 %v292
  %1435 = vmatprep.subr.mxu0 0.0
  %1436 = vmatpush1.msra.mxu0 %v293
  %1437 = vmatprep.subr.mxu0 0.0
  %1438 = vmatpush1.msra.mxu0 0.0
  %1439 = vmatprep.subr.mxu0 0.0
  %1440 = vmatpush1.msra.mxu0 0.0
  %1441 = vmatprep.subr.mxu0 0.0
  %1442 = vmatpush1.msra.mxu0 0.0
  %1443 = vmatprep.subr.mxu0 0.0
  %1444 = vmatpush1.msra.mxu0 0.0
  %1445 = vmatprep.subr.mxu0 0.0
  %1446 = vmatpush1.msra.mxu0 0.0
  %1447 = vmatprep.subr.mxu0 0.0
  %1448 = vmatpush1.msra.mxu0 0.0
  %1449 = vmatprep.subr.mxu0 0.0
  %1450 = vmatpush1.msra.mxu0 0.0
  %1451 = vmatprep.subr.mxu0 0.0
  %1452 = vmatpush1.msra.mxu0 0.0
  %1453 = vmatprep.subr.mxu0 0.0
  %1454 = vmatpush1.msra.mxu0 0.0
  %1455 = vmatprep.subr.mxu0 0.0
  %1456 = vmatpush1.msra.mxu0 0.0
  %1457 = vmatprep.subr.mxu0 0.0
  %1458 = vmatpush1.msra.mxu0 0.0
  %1459 = vmatprep.subr.mxu0 0.0
  %1460 = vmatpush1.msra.mxu0 0.0
  %1461 = vmatprep.subr.mxu0 0.0
  %1462 = vmatpush1.msra.mxu0 0.0
  %1463 = vmatprep.subr.mxu0 0.0
  %1464 = vmatpush1.msra.mxu0 0.0
  %1465 = vmatprep.subr.mxu0 0.0
  %1466 = vmatpush1.msra.mxu0 0.0
  %1467 = vmatprep.subr.mxu0 0.0
  %1468 = vmatpush1.msra.mxu0 0.0
  %1469 = vmatprep.mubr.f32.mxu0 0.0
  %1470 = vmatmul.mubr.f32.gmra.mrb[0].mxu0 %v1333
  %v1471 = vpop.f32.mrb[0].mxu0
  %v1472 = vadd.f32 0.0, %v1471
  %v1473 = vpop.f32.mrb[0].mxu0
  %1474 = vdwg.mxu0
  %v1475 = vmul.f32 %v1472, 0.001953125
  %v1476 = vmul.f32 %v1404, %v1404
  %v1477 = vsub.f32 %v1475, %v1476
  %v1478 = vadd.f32 %v1477, 1e-05
  %v1479 = vrsqrt.pop %v1478
  %v1480 = vmul.f32 %v989, %v1479
  %v1481 = vmul.f32 %v1404, %v1480
  %v1482 = vsub.f32 %v990, %v1481
  %v1484 = vsel %vm814, %v1480, 0
  %1486 = vmatprep.subr.mxu0 0.0
  %1487 = vmatpush1.msra.mxu0 %v38
  %1488 = vmatprep.subr.mxu0 0.0
  %1489 = vmatpush1.msra.mxu0 0.0
  %1490 = vmatprep.subr.mxu0 0.0
  %1491 = vmatpush1.msra.mxu0 0.0
  %1492 = vmatprep.subr.mxu0 0.0
  %1493 = vmatpush1.msra.mxu0 0.0
  %1494 = vmatprep.subr.mxu0 0.0
  %1495 = vmatpush1.msra.mxu0 0.0
  %1496 = vmatprep.subr.mxu0 0.0
  %1497 = vmatpush1.msra.mxu0 0.0
  %1498 = vmatprep.subr.mxu0 0.0
  %1499 = vmatpush1.msra.mxu0 0.0
  %1500 = vmatprep.subr.mxu0 0.0
  %1501 = vmatpush1.msra.mxu0 0.0
  %1502 = vmatprep.subr.mxu0 0.0
  %1503 = vmatpush1.msra.mxu0 0.0
  %1504 = vmatprep.subr.mxu0 0.0
  %1505 = vmatpush1.msra.mxu0 0.0
  %1506 = vmatprep.subr.mxu0 0.0
  %1507 = vmatpush1.msra.mxu0 0.0
  %1508 = vmatprep.subr.mxu0 0.0
  %1509 = vmatpush1.msra.mxu0 0.0
  %1510 = vmatprep.subr.mxu0 0.0
  %1511 = vmatpush1.msra.mxu0 0.0
  %1512 = vmatprep.subr.mxu0 0.0
  %1513 = vmatpush1.msra.mxu0 0.0
  %1514 = vmatprep.subr.mxu0 0.0
  %1515 = vmatpush1.msra.mxu0 0.0
  %1516 = vmatprep.subr.mxu0 0.0
  %1517 = vmatpush1.msra.mxu0 0.0
  %1518 = vmatprep.subr.mxu0 0.0
  %1519 = vmatpush1.msra.mxu0 0.0
  %1520 = vmatprep.subr.mxu0 0.0
  %1521 = vmatpush1.msra.mxu0 0.0
  %1522 = vmatprep.subr.mxu0 0.0
  %1523 = vmatpush1.msra.mxu0 0.0
  %1524 = vmatprep.subr.mxu0 0.0
  %1525 = vmatpush1.msra.mxu0 0.0
  %1526 = vmatprep.subr.mxu0 0.0
  %1527 = vmatpush1.msra.mxu0 0.0
  %1528 = vmatprep.subr.mxu0 0.0
  %1529 = vmatpush1.msra.mxu0 0.0
  %1530 = vmatprep.subr.mxu0 0.0
  %1531 = vmatpush1.msra.mxu0 0.0
  %1532 = vmatprep.subr.mxu0 0.0
  %1533 = vmatpush1.msra.mxu0 0.0
  %1534 = vmatprep.subr.mxu0 0.0
  %1535 = vmatpush1.msra.mxu0 0.0
  %1536 = vmatprep.subr.mxu0 0.0
  %1537 = vmatpush1.msra.mxu0 0.0
  %1538 = vmatprep.subr.mxu0 0.0
  %1539 = vmatpush1.msra.mxu0 0.0
  %1540 = vmatprep.subr.mxu0 0.0
  %1541 = vmatpush1.msra.mxu0 0.0
  %1542 = vmatprep.subr.mxu0 0.0
  %1543 = vmatpush1.msra.mxu0 0.0
  %1544 = vmatprep.subr.mxu0 0.0
  %1545 = vmatpush1.msra.mxu0 0.0
  %1546 = vmatprep.subr.mxu0 0.0
  %1547 = vmatpush1.msra.mxu0 0.0
  %1548 = vmatprep.subr.mxu0 0.0
  %1549 = vmatpush1.msra.mxu0 0.0
  %1550 = vmatprep.mubr.f32.mxu0 0.0
  %1551 = vmatmul.mubr.f32.gmra.mrb[0].mxu0 %v1484
  %v1552 = vpop.f32.mrb[0].mxu0
  %v1553 = vadd.f32 0.0, %v1552
  %v1554 = vpop.f32.mrb[0].mxu0
  %1555 = vdwg.mxu0
  %v1557 = vsel %vm814, %v1482, 0
  %1559 = vmatprep.subr.mxu0 0.0
  %1560 = vmatpush1.msra.mxu0 %v38
  %1561 = vmatprep.subr.mxu0 0.0
  %1562 = vmatpush1.msra.mxu0 0.0
  %1563 = vmatprep.subr.mxu0 0.0
  %1564 = vmatpush1.msra.mxu0 0.0
  %1565 = vmatprep.subr.mxu0 0.0
  %1566 = vmatpush1.msra.mxu0 0.0
  %1567 = vmatprep.subr.mxu0 0.0
  %1568 = vmatpush1.msra.mxu0 0.0
  %1569 = vmatprep.subr.mxu0 0.0
  %1570 = vmatpush1.msra.mxu0 0.0
  %1571 = vmatprep.subr.mxu0 0.0
  %1572 = vmatpush1.msra.mxu0 0.0
  %1573 = vmatprep.subr.mxu0 0.0
  %1574 = vmatpush1.msra.mxu0 0.0
  %1575 = vmatprep.subr.mxu0 0.0
  %1576 = vmatpush1.msra.mxu0 0.0
  %1577 = vmatprep.subr.mxu0 0.0
  %1578 = vmatpush1.msra.mxu0 0.0
  %1579 = vmatprep.subr.mxu0 0.0
  %1580 = vmatpush1.msra.mxu0 0.0
  %1581 = vmatprep.subr.mxu0 0.0
  %1582 = vmatpush1.msra.mxu0 0.0
  %1583 = vmatprep.subr.mxu0 0.0
  %1584 = vmatpush1.msra.mxu0 0.0
  %1585 = vmatprep.subr.mxu0 0.0
  %1586 = vmatpush1.msra.mxu0 0.0
  %1587 = vmatprep.subr.mxu0 0.0
  %1588 = vmatpush1.msra.mxu0 0.0
  %1589 = vmatprep.subr.mxu0 0.0
  %1590 = vmatpush1.msra.mxu0 0.0
  %1591 = vmatprep.subr.mxu0 0.0
  %1592 = vmatpush1.msra.mxu0 0.0
  %1593 = vmatprep.subr.mxu0 0.0
  %1594 = vmatpush1.msra.mxu0 0.0
  %1595 = vmatprep.subr.mxu0 0.0
  %1596 = vmatpush1.msra.mxu0 0.0
  %1597 = vmatprep.subr.mxu0 0.0
  %1598 = vmatpush1.msra.mxu0 0.0
  %1599 = vmatprep.subr.mxu0 0.0
  %1600 = vmatpush1.msra.mxu0 0.0
  %1601 = vmatprep.subr.mxu0 0.0
  %1602 = vmatpush1.msra.mxu0 0.0
  %1603 = vmatprep.subr.mxu0 0.0
  %1604 = vmatpush1.msra.mxu0 0.0
  %1605 = vmatprep.subr.mxu0 0.0
  %1606 = vmatpush1.msra.mxu0 0.0
  %1607 = vmatprep.subr.mxu0 0.0
  %1608 = vmatpush1.msra.mxu0 0.0
  %1609 = vmatprep.subr.mxu0 0.0
  %1610 = vmatpush1.msra.mxu0 0.0
  %1611 = vmatprep.subr.mxu0 0.0
  %1612 = vmatpush1.msra.mxu0 0.0
  %1613 = vmatprep.subr.mxu0 0.0
  %1614 = vmatpush1.msra.mxu0 0.0
  %1615 = vmatprep.subr.mxu0 0.0
  %1616 = vmatpush1.msra.mxu0 0.0
  %1617 = vmatprep.subr.mxu0 0.0
  %1618 = vmatpush1.msra.mxu0 0.0
  %1619 = vmatprep.subr.mxu0 0.0
  %1620 = vmatpush1.msra.mxu0 0.0
  %1621 = vmatprep.subr.mxu0 0.0
  %1622 = vmatpush1.msra.mxu0 0.0
  %1623 = vmatprep.mubr.f32.mxu0 0.0
  %1624 = vmatmul.mubr.f32.gmra.mrb[0].mxu0 %v1557
  %v1625 = vpop.f32.mrb[0].mxu0
  %v1626 = vadd.f32 0.0, %v1625
  %v1627 = vpop.f32.mrb[0].mxu0
  %1628 = vdwg.mxu0
  %v1629 = vlaneseq
  %v1630 = vshrl.u32 %v1629, 7
  %v1631 = vsub.s32 0, %v1630
  %v1632 = vrot.slane %v1553, %v1631
  %v1633 = vmul.f32 %v1308, %v1632
  %v1634 = vmul.f32 %v1309, %v1632
  %v1635 = vmul.f32 %v1310, %v1632
  %v1636 = vmul.f32 %v1311, %v1632
  %v1637 = vlaneseq
  %v1638 = vshrl.u32 %v1637, 7
  %v1639 = vsub.s32 0, %v1638
  %v1640 = vrot.slane %v1626, %v1639
  %v1641 = vadd.f32 %v1633, %v1640
  %v1642 = vadd.f32 %v1634, %v1640
  %v1643 = vadd.f32 %v1635, %v1640
  %v1644 = vadd.f32 %v1636, %v1640
  %v1645 = vmax.f32 %v1641, 0.0
  %v1646 = vmax.f32 %v1642, 0.0
  %v1647 = vmax.f32 %v1643, 0.0
  %v1648 = vmax.f32 %v1644, 0.0
  %v1649 = vld [vmem:[%s3] sm:$0xff]
  %v1650 = vld [vmem:[%s3 + $0x8] sm:$0xff]
  %v1651 = vld [vmem:[%s3 + $0x10] sm:$0xff]
  %v1652 = vld [vmem:[%s3 + $0x18] sm:$0xff]
  %v1653 = vld [vmem:[%s3 + $0x20] sm:$0xff]
  %v1654 = vld [vmem:[%s3 + $0x28] sm:$0xff]
  %v1655 = vld [vmem:[%s3 + $0x30] sm:$0xff]
  %v1656 = vld [vmem:[%s3 + $0x38] sm:$0xff]
  %v1657 = vld [vmem:[%s3 + $0x40] sm:$0xff]
  %v1658 = vld [vmem:[%s3 + $0x48] sm:$0xff]
  %v1659 = vld [vmem:[%s3 + $0x50] sm:$0xff]
  %v1660 = vld [vmem:[%s3 + $0x58] sm:$0xff]
  %v1661 = vld [vmem:[%s3 + $0x60] sm:$0xff]
  %v1662 = vld [vmem:[%s3 + $0x68] sm:$0xff]
  %v1663 = vld [vmem:[%s3 + $0x70] sm:$0xff]
  %v1664 = vld [vmem:[%s3 + $0x78] sm:$0xff]
  %v1665 = vld [vmem:[%s3 + $0x80] sm:$0xff]
  %v1666 = vld [vmem:[%s3 + $0x88] sm:$0xff]
  %v1667 = vld [vmem:[%s3 + $0x90] sm:$0xff]
  %v1668 = vld [vmem:[%s3 + $0x98] sm:$0xff]
  %v1669 = vld [vmem:[%s3 + $0xa0] sm:$0xff]
  %v1670 = vld [vmem:[%s3 + $0xa8] sm:$0xff]
  %v1671 = vld [vmem:[%s3 + $0xb0] sm:$0xff]
  %v1672 = vld [vmem:[%s3 + $0xb8] sm:$0xff]
  %v1673 = vld [vmem:[%s3 + $0xc0] sm:$0xff]
  %v1674 = vld [vmem:[%s3 + $0xc8] sm:$0xff]
  %v1675 = vld [vmem:[%s3 + $0xd0] sm:$0xff]
  %v1676 = vld [vmem:[%s3 + $0xd8] sm:$0xff]
  %v1677 = vld [vmem:[%s3 + $0xe0] sm:$0xff]
  %v1678 = vld [vmem:[%s3 + $0xe8] sm:$0xff]
  %v1679 = vld [vmem:[%s3 + $0xf0] sm:$0xff]
  %v1680 = vld [vmem:[%s3 + $0xf8] sm:$0xff]
  %v1681 = vld [vmem:[%s3 + $0x100] sm:$0xff]
  %v1682 = vld [vmem:[%s3 + $0x108] sm:$0xff]
  %v1683 = vld [vmem:[%s3 + $0x110] sm:$0xff]
  %v1684 = vld [vmem:[%s3 + $0x118] sm:$0xff]
  %v1685 = vld [vmem:[%s3 + $0x120] sm:$0xff]
  %v1686 = vld [vmem:[%s3 + $0x128] sm:$0xff]
  %v1687 = vld [vmem:[%s3 + $0x130] sm:$0xff]
  %v1688 = vld [vmem:[%s3 + $0x138] sm:$0xff]
  %v1689 = vld [vmem:[%s3 + $0x140] sm:$0xff]
  %v1690 = vld [vmem:[%s3 + $0x148] sm:$0xff]
  %v1691 = vld [vmem:[%s3 + $0x150] sm:$0xff]
  %v1692 = vld [vmem:[%s3 + $0x158] sm:$0xff]
  %v1693 = vld [vmem:[%s3 + $0x160] sm:$0xff]
  %v1694 = vld [vmem:[%s3 + $0x168] sm:$0xff]
  %v1695 = vld [vmem:[%s3 + $0x170] sm:$0xff]
  %v1696 = vld [vmem:[%s3 + $0x178] sm:$0xff]
  %v1697 = vld [vmem:[%s3 + $0x180] sm:$0xff]
  %v1698 = vld [vmem:[%s3 + $0x188] sm:$0xff]
  %v1699 = vld [vmem:[%s3 + $0x190] sm:$0xff]
  %v1700 = vld [vmem:[%s3 + $0x198] sm:$0xff]
  %v1701 = vld [vmem:[%s3 + $0x1a0] sm:$0xff]
  %v1702 = vld [vmem:[%s3 + $0x1a8] sm:$0xff]
  %v1703 = vld [vmem:[%s3 + $0x1b0] sm:$0xff]
  %v1704 = vld [vmem:[%s3 + $0x1b8] sm:$0xff]
  %v1705 = vld [vmem:[%s3 + $0x1c0] sm:$0xff]
  %v1706 = vld [vmem:[%s3 + $0x1c8] sm:$0xff]
  %v1707 = vld [vmem:[%s3 + $0x1d0] sm:$0xff]
  %v1708 = vld [vmem:[%s3 + $0x1d8] sm:$0xff]
  %v1709 = vld [vmem:[%s3 + $0x1e0] sm:$0xff]
  %v1710 = vld [vmem:[%s3 + $0x1e8] sm:$0xff]
  %v1711 = vld [vmem:[%s3 + $0x1f0] sm:$0xff]
  %v1712 = vld [vmem:[%s3 + $0x1f8] sm:$0xff]
  %s1713 = scalar_lea.vmem %s4, 4
  %v1714 = vld [vmem:[%s1713] ss:$8 sm:$0xf]
  %v1716 = vlaneseq
  %v1717 = vshrl.u32 %v1716, 7
  %v1718 = vsub.s32 0, %v1717
  %v1719 = vrot.slane %v1714, %v1718
  %v1720 = vlaneseq
  %v1721 = vshrl.u32 %v1720, 7
  %v1722 = vsub.s32 1, %v1721
  %v1723 = vrot.slane %v1714, %v1722
  %v1724 = vlaneseq
  %v1725 = vshrl.u32 %v1724, 7
  %v1726 = vsub.s32 2, %v1725
  %v1727 = vrot.slane %v1714, %v1726
  %v1728 = vlaneseq
  %v1729 = vshrl.u32 %v1728, 7
  %v1730 = vsub.s32 3, %v1729
  %v1731 = vrot.slane %v1714, %v1730
  %1736 = vmatprep.subr.mxu0 %v1650
  %1737 = vmatpush1.msra.mxu0 %v1649
  %1738 = vmatprep.subr.mxu0 %v1654
  %1739 = vmatpush1.msra.mxu0 %v1653
  %1740 = vmatprep.subr.mxu0 %v1658
  %1741 = vmatpush1.msra.mxu0 %v1657
  %1742 = vmatprep.subr.mxu0 %v1662
  %1743 = vmatpush1.msra.mxu0 %v1661
  %1744 = vmatprep.subr.mxu0 %v1666
  %1745 = vmatpush1.msra.mxu0 %v1665
  %1746 = vmatprep.subr.mxu0 %v1670
  %1747 = vmatpush1.msra.mxu0 %v1669
  %1748 = vmatprep.subr.mxu0 %v1674
  %1749 = vmatpush1.msra.mxu0 %v1673
  %1750 = vmatprep.subr.mxu0 %v1678
  %1751 = vmatpush1.msra.mxu0 %v1677
  %1752 = vmatprep.subr.mxu0 %v1682
  %1753 = vmatpush1.msra.mxu0 %v1681
  %1754 = vmatprep.subr.mxu0 %v1686
  %1755 = vmatpush1.msra.mxu0 %v1685
  %1756 = vmatprep.subr.mxu0 %v1690
  %1757 = vmatpush1.msra.mxu0 %v1689
  %1758 = vmatprep.subr.mxu0 %v1694
  %1759 = vmatpush1.msra.mxu0 %v1693
  %1760 = vmatprep.subr.mxu0 %v1698
  %1761 = vmatpush1.msra.mxu0 %v1697
  %1762 = vmatprep.subr.mxu0 %v1702
  %1763 = vmatpush1.msra.mxu0 %v1701
  %1764 = vmatprep.subr.mxu0 %v1706
  %1765 = vmatpush1.msra.mxu0 %v1705
  %1766 = vmatprep.subr.mxu0 %v1710
  %1767 = vmatpush1.msra.mxu0 %v1709
  %1768 = vmatprep.subr.mxu0 0.0
  %1769 = vmatpush1.msra.mxu0 0.0
  %1770 = vmatprep.subr.mxu0 0.0
  %1771 = vmatpush1.msra.mxu0 0.0
  %1772 = vmatprep.subr.mxu0 0.0
  %1773 = vmatpush1.msra.mxu0 0.0
  %1774 = vmatprep.subr.mxu0 0.0
  %1775 = vmatpush1.msra.mxu0 0.0
  %1776 = vmatprep.subr.mxu0 0.0
  %1777 = vmatpush1.msra.mxu0 0.0
  %1778 = vmatprep.subr.mxu0 0.0
  %1779 = vmatpush1.msra.mxu0 0.0
  %1780 = vmatprep.subr.mxu0 0.0
  %1781 = vmatpush1.msra.mxu0 0.0
  %1782 = vmatprep.subr.mxu0 0.0
  %1783 = vmatpush1.msra.mxu0 0.0
  %1784 = vmatprep.subr.mxu0 0.0
  %1785 = vmatpush1.msra.mxu0 0.0
  %1786 = vmatprep.subr.mxu0 0.0
  %1787 = vmatpush1.msra.mxu0 0.0
  %1788 = vmatprep.subr.mxu0 0.0
  %1789 = vmatpush1.msra.mxu0 0.0
  %1790 = vmatprep.subr.mxu0 0.0
  %1791 = vmatpush1.msra.mxu0 0.0
  %1792 = vmatprep.subr.mxu0 0.0
  %1793 = vmatpush1.msra.mxu0 0.0
  %1794 = vmatprep.subr.mxu0 0.0
  %1795 = vmatpush1.msra.mxu0 0.0
  %1796 = vmatprep.subr.mxu0 0.0
  %1797 = vmatpush1.msra.mxu0 0.0
  %1798 = vmatprep.subr.mxu0 0.0
  %1799 = vmatpush1.msra.mxu0 0.0
  %1800 = vmatprep.mubr.f32.mxu0 0.0
  %1801 = vmatmul.mubr.f32.gmra.mrb[0].mxu0 %v1645
  %v1802 = vpop.f32.mrb[0].mxu0
  %v1803 = vadd.f32 %v1719, %v1802
  %v1804 = vpop.f32.mrb[0].mxu0
  %v1805 = vadd.f32 %v1723, %v1804
  %1806 = vmatprep.mubr.f32.mxu0 0.0
  %1807 = vmatmul.mubr.f32.gmra.mrb[0].mxu0 %v1646
  %v1808 = vpop.f32.mrb[0].mxu0
  %v1809 = vadd.f32 %v1719, %v1808
  %v1810 = vpop.f32.mrb[0].mxu0
  %v1811 = vadd.f32 %v1723, %v1810
  %1812 = vmatprep.mubr.f32.mxu0 0.0
  %1813 = vmatmul.mubr.f32.gmra.mrb[0].mxu0 %v1647
  %v1814 = vpop.f32.mrb[0].mxu0
  %v1815 = vadd.f32 %v1719, %v1814
  %v1816 = vpop.f32.mrb[0].mxu0
  %v1817 = vadd.f32 %v1723, %v1816
  %1818 = vmatprep.mubr.f32.mxu0 0.0
  %1819 = vmatmul.mubr.f32.gmra.mrb[0].mxu0 %v1648
  %v1820 = vpop.f32.mrb[0].mxu0
  %v1821 = vadd.f32 %v1719, %v1820
  %v1822 = vpop.f32.mrb[0].mxu0
  %v1823 = vadd.f32 %v1723, %v1822
  %1824 = vdwg.mxu0
  %1825 = vmatprep.subr.mxu0 %v1652
  %1826 = vmatpush1.msra.mxu0 %v1651
  %1827 = vmatprep.subr.mxu0 %v1656
  %1828 = vmatpush1.msra.mxu0 %v1655
  %1829 = vmatprep.subr.mxu0 %v1660
  %1830 = vmatpush1.msra.mxu0 %v1659
  %1831 = vmatprep.subr.mxu0 %v1664
  %1832 = vmatpush1.msra.mxu0 %v1663
  %1833 = vmatprep.subr.mxu0 %v1668
  %1834 = vmatpush1.msra.mxu0 %v1667
  %1835 = vmatprep.subr.mxu0 %v1672
  %1836 = vmatpush1.msra.mxu0 %v1671
  %1837 = vmatprep.subr.mxu0 %v1676
  %1838 = vmatpush1.msra.mxu0 %v1675
  %1839 = vmatprep.subr.mxu0 %v1680
  %1840 = vmatpush1.msra.mxu0 %v1679
  %1841 = vmatprep.subr.mxu0 %v1684
  %1842 = vmatpush1.msra.mxu0 %v1683
  %1843 = vmatprep.subr.mxu0 %v1688
  %1844 = vmatpush1.msra.mxu0 %v1687
  %1845 = vmatprep.subr.mxu0 %v1692
  %1846 = vmatpush1.msra.mxu0 %v1691
  %1847 = vmatprep.subr.mxu0 %v1696
  %1848 = vmatpush1.msra.mxu0 %v1695
  %1849 = vmatprep.subr.mxu0 %v1700
  %1850 = vmatpush1.msra.mxu0 %v1699
  %1851 = vmatprep.subr.mxu0 %v1704
  %1852 = vmatpush1.msra.mxu0 %v1703
  %1853 = vmatprep.subr.mxu0 %v1708
  %1854 = vmatpush1.msra.mxu0 %v1707
  %1855 = vmatprep.subr.mxu0 %v1712
  %1856 = vmatpush1.msra.mxu0 %v1711
  %1857 = vmatprep.subr.mxu0 0.0
  %1858 = vmatpush1.msra.mxu0 0.0
  %1859 = vmatprep.subr.mxu0 0.0
  %1860 = vmatpush1.msra.mxu0 0.0
  %1861 = vmatprep.subr.mxu0 0.0
  %1862 = vmatpush1.msra.mxu0 0.0
  %1863 = vmatprep.subr.mxu0 0.0
  %1864 = vmatpush1.msra.mxu0 0.0
  %1865 = vmatprep.subr.mxu0 0.0
  %1866 = vmatpush1.msra.mxu0 0.0
  %1867 = vmatprep.subr.mxu0 0.0
  %1868 = vmatpush1.msra.mxu0 0.0
  %1869 = vmatprep.subr.mxu0 0.0
  %1870 = vmatpush1.msra.mxu0 0.0
  %1871 = vmatprep.subr.mxu0 0.0
  %1872 = vmatpush1.msra.mxu0 0.0
  %1873 = vmatprep.subr.mxu0 0.0
  %1874 = vmatpush1.msra.mxu0 0.0
  %1875 = vmatprep.subr.mxu0 0.0
  %1876 = vmatpush1.msra.mxu0 0.0
  %1877 = vmatprep.subr.mxu0 0.0
  %1878 = vmatpush1.msra.mxu0 0.0
  %1879 = vmatprep.subr.mxu0 0.0
  %1880 = vmatpush1.msra.mxu0 0.0
  %1881 = vmatprep.subr.mxu0 0.0
  %1882 = vmatpush1.msra.mxu0 0.0
  %1883 = vmatprep.subr.mxu0 0.0
  %1884 = vmatpush1.msra.mxu0 0.0
  %1885 = vmatprep.subr.mxu0 0.0
  %1886 = vmatpush1.msra.mxu0 0.0
  %1887 = vmatprep.subr.mxu0 0.0
  %1888 = vmatpush1.msra.mxu0 0.0
  %1889 = vmatprep.mubr.f32.mxu0 0.0
  %1890 = vmatmul.mubr.f32.gmra.mrb[0].mxu0 %v1645
  %v1891 = vpop.f32.mrb[0].mxu0
  %v1892 = vadd.f32 %v1727, %v1891
  %v1893 = vpop.f32.mrb[0].mxu0
  %v1894 = vadd.f32 %v1731, %v1893
  %1895 = vmatprep.mubr.f32.mxu0 0.0
  %1896 = vmatmul.mubr.f32.gmra.mrb[0].mxu0 %v1646
  %v1897 = vpop.f32.mrb[0].mxu0
  %v1898 = vadd.f32 %v1727, %v1897
  %v1899 = vpop.f32.mrb[0].mxu0
  %v1900 = vadd.f32 %v1731, %v1899
  %1901 = vmatprep.mubr.f32.mxu0 0.0
  %1902 = vmatmul.mubr.f32.gmra.mrb[0].mxu0 %v1647
  %v1903 = vpop.f32.mrb[0].mxu0
  %v1904 = vadd.f32 %v1727, %v1903
  %v1905 = vpop.f32.mrb[0].mxu0
  %v1906 = vadd.f32 %v1731, %v1905
  %1907 = vmatprep.mubr.f32.mxu0 0.0
  %1908 = vmatmul.mubr.f32.gmra.mrb[0].mxu0 %v1648
  %v1909 = vpop.f32.mrb[0].mxu0
  %v1910 = vadd.f32 %v1727, %v1909
  %v1911 = vpop.f32.mrb[0].mxu0
  %v1912 = vadd.f32 %v1731, %v1911
  %1913 = vdwg.mxu0
  %1914 = vst [vmem:[%s5] sm:$0xff] %v1803
  %1915 = vst [vmem:[%s5 + $0x8] sm:$0xff] %v1805
  %1916 = vst [vmem:[%s5 + $0x10] sm:$0xff] %v1892
  %1917 = vst [vmem:[%s5 + $0x18] sm:$0xff] %v1894
  %1918 = vst [vmem:[%s5 + $0x20] sm:$0xff] %v1809
  %1919 = vst [vmem:[%s5 + $0x28] sm:$0xff] %v1811
  %1920 = vst [vmem:[%s5 + $0x30] sm:$0xff] %v1898
  %1921 = vst [vmem:[%s5 + $0x38] sm:$0xff] %v1900
  %1922 = vst [vmem:[%s5 + $0x40] sm:$0xff] %v1815
  %1923 = vst [vmem:[%s5 + $0x48] sm:$0xff] %v1817
  %1924 = vst [vmem:[%s5 + $0x50] sm:$0xff] %v1904
  %1925 = vst [vmem:[%s5 + $0x58] sm:$0xff] %v1906
  %1926 = vst [vmem:[%s5 + $0x60] sm:$0xff] %v1821
  %1927 = vst [vmem:[%s5 + $0x68] sm:$0xff] %v1823
  %1928 = vst [vmem:[%s5 + $0x70] sm:$0xff] %v1910
  %1929 = vst [vmem:[%s5 + $0x78] sm:$0xff] %v1912
  // Predicated region
  $region22: #{encoder_decoder_block.1} parent=0 // pred_check
    _
  $region23: #{encoder_decoder_block.1} parent=0 // pred_check_branch
    %1931 = sbr.rel (0) target = $region25
  $region24: #{encoder_decoder_block.1} parent=0 // pred_region
    _
  $region25: #{encoder_decoder_block.1} parent=0 // pred_fallthru
    _
  // Predicated region
  $region26: #{encoder_decoder_block.1} parent=0 // pred_check
    _
  $region27: #{encoder_decoder_block.1} parent=0 // pred_check_branch
    %1933 = sbr.rel (0) target = $region29
  $region28: #{encoder_decoder_block.1} parent=0 // pred_region
    _
  $region29: #{encoder_decoder_block.1} parent=0 // pred_fallthru
    _

</llo_original>
